<compile_context>
chip_gen: v6e
topology: v6e:2x2x1
jax: 0.10.0
libtpu: 0.0.40
codegen_flags: <defaults>
</compile_context>

<pallas_src>
import math

import jax
import jax.numpy as jnp
from jax.experimental import pallas as pl
from jax.experimental.pallas import tpu as pltpu

# ----------------------------- model config (small) -----------------------------
B = 2           # batch
S = 8           # sequence length
D_MODEL = 32    # d_model
NHEAD = 4       # attention heads
HEAD_DIM = D_MODEL // NHEAD
NUM_EXPERTS = 4
FFN_HIDDEN = 2 * D_MODEL        # dim_feedforward
EH = NUM_EXPERTS * FFN_HIDDEN   # stacked expert hidden width
LN_EPS = 1e-5


def _layer_norm(t, g, b):
    mu = jnp.mean(t, axis=-1, keepdims=True)
    var = jnp.mean((t - mu) ** 2, axis=-1, keepdims=True)
    return (t - mu) * jax.lax.rsqrt(var + LN_EPS) * g + b


# ================================ fused Pallas kernel ================================

def fused_layer_kernel(x_ref, ln1g_ref, ln1b_ref, wqkv_ref, bqkv_ref,
                       wo_ref, bo_ref, ln2g_ref, ln2b_ref,
                       gwt_ref, gb_ref, w1_ref, b1_ref, w2_ref, b2_ref,
                       o_ref, onehot_ref):
    # One batch (S tokens) per grid step; x_ref is (S, D).
    x = x_ref[...]

    # --- LN1 + fused QKV projection ---
    n1 = _layer_norm(x, ln1g_ref[...], ln1b_ref[...])
    qkv = (jnp.dot(n1, wqkv_ref[...], preferred_element_type=jnp.float32)
           + bqkv_ref[...])                                   # (S, 3D)
    q = qkv[:, :D_MODEL]
    k = qkv[:, D_MODEL:2 * D_MODEL]
    v = qkv[:, 2 * D_MODEL:]

    # --- multi-head attention (no per-head loop) ---
    # Head-h masked copy of Q contracts against K only over that head's columns, so stacking
    # the NHEAD masked copies along the sublane axis turns the whole attention into two
    # MXU pushes: (NHEAD*S, D) @ (S, D)^T and (NHEAD*S, S) @ (S, D).
    scale = 1.0 / math.sqrt(HEAD_DIM)
    hrow = jax.lax.broadcasted_iota(jnp.int32, (NHEAD, D_MODEL), 0)   # head id per row
    dcol = jax.lax.broadcasted_iota(jnp.int32, (NHEAD, D_MODEL), 1)   # column id
    head_mask = ((dcol >= hrow * HEAD_DIM)
                 & (dcol < (hrow + 1) * HEAD_DIM))[:, None, :]        # (NHEAD, 1, D)

    q_stacked = jnp.where(head_mask, q[None, :, :], 0.0)              # (NHEAD, S, D)
    q_stacked = q_stacked.reshape(NHEAD * S, D_MODEL)                 # (NHEAD*S, D)

    s = jax.lax.dot_general(q_stacked, k, (((1,), (1,)), ((), ())),
                            preferred_element_type=jnp.float32) * scale   # (NHEAD*S, S)
    s = s - jnp.max(s, axis=-1, keepdims=True)
    p = jnp.exp(s)
    p = p * pl.reciprocal(jnp.sum(p, axis=-1, keepdims=True), approx=True)
    o_all = jnp.dot(p, v, preferred_element_type=jnp.float32)             # (NHEAD*S, D)
    o_all = o_all.reshape(NHEAD, S, D_MODEL)
    attn = jnp.sum(jnp.where(head_mask, o_all, 0.0), axis=0)              # (S, D)

    attn = (jnp.dot(attn, wo_ref[...], preferred_element_type=jnp.float32)
            + bo_ref[...])
    x1 = x + attn                                             # dropout1 = identity

    # --- LN2 + MoE gate (top-1; softmax over a single logit == 1.0) ---
    n2 = _layer_norm(x1, ln2g_ref[...], ln2b_ref[...])
    logits = (jnp.dot(n2, gwt_ref[...], preferred_element_type=jnp.float32)
              + gb_ref[...])                                  # (S, E)
    maxv = jnp.max(logits, axis=-1, keepdims=True)
    eidx = jax.lax.broadcasted_iota(jnp.int32, logits.shape, 1)
    # first index attaining the max (matches torch.topk / argmax tie behavior)
    sel = jnp.min(jnp.where(logits == maxv, eidx, NUM_EXPERTS),
                  axis=-1, keepdims=True)                     # (S, 1)
    one_hot = (eidx == sel).astype(jnp.float32)               # (S, E)
    onehot_ref[...] = one_hot                                 # -> expert load counts

    # --- MoE experts: one stacked W1 matmul + per-token expert mask + one W2 matmul ---
    h_all = jnp.maximum(
        jnp.dot(n2, w1_ref[...], preferred_element_type=jnp.float32) + b1_ref[...],
        0.0)                                                  # (S, E*H)
    col = jax.lax.broadcasted_iota(jnp.int32, h_all.shape, 1)
    lo = sel * FFN_HIDDEN
    expert_cols = (col >= lo) & (col < lo + FFN_HIDDEN)       # (S, E*H)
    h_sel = jnp.where(expert_cols, h_all, 0.0)
    y = jnp.dot(h_sel, w2_ref[...], preferred_element_type=jnp.float32)      # (S, D)
    y = y + jnp.dot(one_hot, b2_ref[...], preferred_element_type=jnp.float32)
    # top_k = 1  =>  gate weight = 1.0  (Dropout inside experts = identity)
    o_ref[...] = x1 + y                                       # dropout2 = identity


# ================================ wrapper ================================

def moe_transformer_encoder_layer(src, p):
    b, s, d = src.shape
    n = b * s
    x = src.reshape(n, d)

    # Weight prep (one-time, host side): stack experts for single-matmul layout.
    w1s = p["w1"].transpose(1, 0, 2).reshape(d, EH)   # (D, E*H): [d, e*H + h] = w1[e, d, h]
    b1s = p["b1"].reshape(1, EH)
    w2s = p["w2"].reshape(EH, d)                      # (E*H, D): [e*H + h, d] = w2[e, h, d]

    rep = lambda i: (0, 0)   # weights: same block every grid step (no re-DMA)

    out, one_hot = pl.pallas_call(
        fused_layer_kernel,
        out_shape=(jax.ShapeDtypeStruct((n, d), jnp.float32),
                   jax.ShapeDtypeStruct((n, NUM_EXPERTS), jnp.float32)),
        grid=(b,),
        in_specs=[
            pl.BlockSpec((s, d), lambda i: (i, 0)),              # x (per-batch tile)
            pl.BlockSpec((1, d), rep),                           # ln1 gamma
            pl.BlockSpec((1, d), rep),                           # ln1 beta
            pl.BlockSpec((d, 3 * d), rep),                       # in_proj W^T
            pl.BlockSpec((1, 3 * d), rep),                       # in_proj b
            pl.BlockSpec((d, d), rep),                           # out_proj W^T
            pl.BlockSpec((1, d), rep),                           # out_proj b
            pl.BlockSpec((1, d), rep),                           # ln2 gamma
            pl.BlockSpec((1, d), rep),                           # ln2 beta
            pl.BlockSpec((d, NUM_EXPERTS), rep),                 # gate W^T
            pl.BlockSpec((1, NUM_EXPERTS), rep),                 # gate b
            pl.BlockSpec((d, EH), rep),                          # stacked W1
            pl.BlockSpec((1, EH), rep),                          # stacked b1
            pl.BlockSpec((EH, d), rep),                          # stacked W2
            pl.BlockSpec((NUM_EXPERTS, d), rep),                 # b2 (per-expert)
        ],
        out_specs=(
            pl.BlockSpec((s, d), lambda i: (i, 0)),              # layer output
            pl.BlockSpec((s, NUM_EXPERTS), lambda i: (i, 0)),    # expert one-hot
        ),
        compiler_params=pltpu.CompilerParams(
            dimension_semantics=("parallel",)),                  # 2-way split for v7x megacore
    )(x,
      p["ln1_g"].reshape(1, d), p["ln1_b"].reshape(1, d),
      p["in_proj_w"].T, p["in_proj_b"].reshape(1, 3 * d),
      p["out_proj_w"].T, p["out_proj_b"].reshape(1, d),
      p["ln2_g"].reshape(1, d), p["ln2_b"].reshape(1, d),
      p["gate_w"].T, p["gate_b"].reshape(1, NUM_EXPERTS),
      w1s, b1s, w2s, p["b2"])

    expert_counts = jnp.sum(one_hot, axis=0)                     # (E,) bincount of top-1
    # TODO(synk): aux_loss uses calculate_cv(), which is not defined in the reference module.
    return out.reshape(b, s, d), expert_counts


# ============================== pure-JAX reference ==============================

def reference_forward(src, p):
    b, s, d = src.shape
    x = src.reshape(-1, d)

    def ln(t, g, bb):
        m = t.mean(-1, keepdims=True)
        v = ((t - m) ** 2).mean(-1, keepdims=True)
        return (t - m) / jnp.sqrt(v + LN_EPS) * g + bb

    n1 = ln(x, p["ln1_g"], p["ln1_b"])
    qkv = n1 @ p["in_proj_w"].T + p["in_proj_b"]
    q, k, v = jnp.split(qkv, 3, axis=1)

    def heads(t):
        return t.reshape(b, s, NHEAD, HEAD_DIM).transpose(0, 2, 1, 3)

    qh, kh, vh = heads(q), heads(k), heads(v)
    sc = jnp.einsum("bhqd,bhkd->bhqk", qh, kh) / math.sqrt(HEAD_DIM)
    pr = jax.nn.softmax(sc, axis=-1)
    a = jnp.einsum("bhqk,bhkd->bhqd", pr, vh).transpose(0, 2, 1, 3).reshape(-1, d)
    x = x + (a @ p["out_proj_w"].T + p["out_proj_b"])

    n2 = ln(x, p["ln2_g"], p["ln2_b"])
    gl = n2 @ p["gate_w"].T + p["gate_b"]
    top1 = jnp.argmax(gl, axis=1)
    outs = []
    for e in range(NUM_EXPERTS):
        h = jax.nn.relu(n2 @ p["w1"][e] + p["b1"][e])
        outs.append(h @ p["w2"][e] + p["b2"][e])
    outs = jnp.stack(outs, axis=0)                              # (E, N, D)
    sel = outs[top1, jnp.arange(x.shape[0])]
    x = x + sel
    counts = jnp.sum(jax.nn.one_hot(top1, NUM_EXPERTS, dtype=jnp.float32), axis=0)
    return x.reshape(b, s, d), counts


# ===================================== main =====================================

if __name__ == "__main__":
    key = jax.random.PRNGKey(0)
    ks = jax.random.split(key, 20)

    def rnd(k, shape, scale=0.1):
        return (scale * jax.random.normal(k, shape)).astype(jnp.float32)

    params = {
        "ln1_g": 1.0 + rnd(ks[0], (D_MODEL,)),
        "ln1_b": rnd(ks[1], (D_MODEL,)),
        "ln2_g": 1.0 + rnd(ks[2], (D_MODEL,)),
        "ln2_b": rnd(ks[3], (D_MODEL,)),
        # nn.MultiheadAttention params
        "in_proj_w": rnd(ks[4], (3 * D_MODEL, D_MODEL)),
        "in_proj_b": rnd(ks[5], (3 * D_MODEL,)),
        "out_proj_w": rnd(ks[6], (D_MODEL, D_MODEL)),
        "out_proj_b": rnd(ks[7], (D_MODEL,)),
        # MoE gate (torch Linear: weight (E, D))
        "gate_w": rnd(ks[8], (NUM_EXPERTS, D_MODEL)),
        "gate_b": rnd(ks[9], (NUM_EXPERTS,)),
        # experts, stacked & pre-transposed to x @ W layout
        "w1": rnd(ks[10], (NUM_EXPERTS, D_MODEL, FFN_HIDDEN)),
        "b1": rnd(ks[11], (NUM_EXPERTS, FFN_HIDDEN)),
        "w2": rnd(ks[12], (NUM_EXPERTS, FFN_HIDDEN, D_MODEL)),
        "b2": rnd(ks[13], (NUM_EXPERTS, D_MODEL)),
    }

    src = jax.random.normal(ks[14], (B, S, D_MODEL), dtype=jnp.float32)

    out, expert_counts = moe_transformer_encoder_layer(src, params)
    out = jax.block_until_ready(out)
    expert_counts = jax.block_until_ready(expert_counts)

    ref_out, ref_counts = reference_forward(src, params)
    ref_out = jax.block_until_ready(ref_out)

    assert out.shape == (B, S, D_MODEL)
    assert expert_counts.shape == (NUM_EXPERTS,)
    assert jnp.allclose(out, ref_out, atol=1e-2, rtol=1e-2), "output mismatch vs reference"
    assert jnp.allclose(expert_counts, ref_counts), "expert_counts mismatch vs reference"

    print("KERNEL_OK")
</pallas_src>

<mosaic_0001>
module attributes {stable_mosaic.version = 11 : i64} {
  func.func @fused_layer_kernel(%arg0: i32, %arg1: memref<8x32xf32, #tpu.memory_space<vmem>>, %arg2: memref<1x32xf32, #tpu.memory_space<vmem>>, %arg3: memref<1x32xf32, #tpu.memory_space<vmem>>, %arg4: memref<32x96xf32, #tpu.memory_space<vmem>>, %arg5: memref<1x96xf32, #tpu.memory_space<vmem>>, %arg6: memref<32x32xf32, #tpu.memory_space<vmem>>, %arg7: memref<1x32xf32, #tpu.memory_space<vmem>>, %arg8: memref<1x32xf32, #tpu.memory_space<vmem>>, %arg9: memref<1x32xf32, #tpu.memory_space<vmem>>, %arg10: memref<32x4xf32, #tpu.memory_space<vmem>>, %arg11: memref<1x4xf32, #tpu.memory_space<vmem>>, %arg12: memref<32x256xf32, #tpu.memory_space<vmem>>, %arg13: memref<1x256xf32, #tpu.memory_space<vmem>>, %arg14: memref<256x32xf32, #tpu.memory_space<vmem>>, %arg15: memref<4x32xf32, #tpu.memory_space<vmem>>, %arg16: memref<8x32xf32, #tpu.memory_space<vmem>>, %arg17: memref<8x4xf32, #tpu.memory_space<vmem>>) attributes {dimension_semantics = [#tpu.dimension_semantics<parallel>], iteration_bounds = array<i64: 2>, scalar_prefetch = 0 : i64, scratch_operands = 0 : i64, tpu.core_type = #tpu.core_type<tc>, window_params = [{transform_indices = @transform_0, window_bounds = array<i64: 8, 32>}, {pipeline_mode = #tpu.pipeline_mode<synchronous>, transform_indices = @transform_1, window_bounds = array<i64: 1, 32>}, {pipeline_mode = #tpu.pipeline_mode<synchronous>, transform_indices = @transform_2, window_bounds = array<i64: 1, 32>}, {pipeline_mode = #tpu.pipeline_mode<synchronous>, transform_indices = @transform_3, window_bounds = array<i64: 32, 96>}, {pipeline_mode = #tpu.pipeline_mode<synchronous>, transform_indices = @transform_4, window_bounds = array<i64: 1, 96>}, {pipeline_mode = #tpu.pipeline_mode<synchronous>, transform_indices = @transform_5, window_bounds = array<i64: 32, 32>}, {pipeline_mode = #tpu.pipeline_mode<synchronous>, transform_indices = @transform_6, window_bounds = array<i64: 1, 32>}, {pipeline_mode = #tpu.pipeline_mode<synchronous>, transform_indices = @transform_7, window_bounds = array<i64: 1, 32>}, {pipeline_mode = #tpu.pipeline_mode<synchronous>, transform_indices = @transform_8, window_bounds = array<i64: 1, 32>}, {pipeline_mode = #tpu.pipeline_mode<synchronous>, transform_indices = @transform_9, window_bounds = array<i64: 32, 4>}, {pipeline_mode = #tpu.pipeline_mode<synchronous>, transform_indices = @transform_10, window_bounds = array<i64: 1, 4>}, {pipeline_mode = #tpu.pipeline_mode<synchronous>, transform_indices = @transform_11, window_bounds = array<i64: 32, 256>}, {pipeline_mode = #tpu.pipeline_mode<synchronous>, transform_indices = @transform_12, window_bounds = array<i64: 1, 256>}, {pipeline_mode = #tpu.pipeline_mode<synchronous>, transform_indices = @transform_13, window_bounds = array<i64: 256, 32>}, {pipeline_mode = #tpu.pipeline_mode<synchronous>, transform_indices = @transform_14, window_bounds = array<i64: 4, 32>}, {transform_indices = @transform_15, window_bounds = array<i64: 8, 32>}, {transform_indices = @transform_16, window_bounds = array<i64: 8, 4>}]} {
    %c0 = arith.constant 0 : index
    %c0_0 = arith.constant 0 : index
    %0 = vector.load %arg1[%c0, %c0_0] : memref<8x32xf32, #tpu.memory_space<vmem>>, vector<8x32xf32>
    %c0_1 = arith.constant 0 : index
    %c0_2 = arith.constant 0 : index
    %1 = vector.load %arg2[%c0_1, %c0_2] : memref<1x32xf32, #tpu.memory_space<vmem>>, vector<1x32xf32>
    %c0_3 = arith.constant 0 : index
    %c0_4 = arith.constant 0 : index
    %2 = vector.load %arg3[%c0_3, %c0_4] : memref<1x32xf32, #tpu.memory_space<vmem>>, vector<1x32xf32>
    %cst = arith.constant dense<0.000000e+00> : vector<8xf32>
    %3 = vector.multi_reduction <add>, %0, %cst [1] : vector<8x32xf32> to vector<8xf32>
    %4 = vector.shape_cast %3 : vector<8xf32> to vector<8x1xf32>
    %cst_5 = arith.constant 3.200000e+01 : f32
    %5 = vector.broadcast %cst_5 : f32 to vector<8x1xf32>
    %6 = arith.divf %4, %5 : vector<8x1xf32>
    %7 = vector.broadcast %6 : vector<8x1xf32> to vector<8x32xf32>
    %8 = arith.subf %0, %7 : vector<8x32xf32>
    %9 = arith.mulf %8, %8 : vector<8x32xf32>
    %cst_6 = arith.constant dense<0.000000e+00> : vector<8xf32>
    %10 = vector.multi_reduction <add>, %9, %cst_6 [1] : vector<8x32xf32> to vector<8xf32>
    %11 = vector.shape_cast %10 : vector<8xf32> to vector<8x1xf32>
    %cst_7 = arith.constant 3.200000e+01 : f32
    %12 = vector.broadcast %cst_7 : f32 to vector<8x1xf32>
    %13 = arith.divf %11, %12 : vector<8x1xf32>
    %14 = vector.broadcast %6 : vector<8x1xf32> to vector<8x32xf32>
    %15 = arith.subf %0, %14 : vector<8x32xf32>
    %cst_8 = arith.constant 9.99999974E-6 : f32
    %16 = vector.broadcast %cst_8 : f32 to vector<8x1xf32>
    %17 = arith.addf %13, %16 : vector<8x1xf32>
    %18 = math.rsqrt %17 : vector<8x1xf32>
    %19 = vector.broadcast %18 : vector<8x1xf32> to vector<8x32xf32>
    %20 = arith.mulf %15, %19 : vector<8x32xf32>
    %21 = vector.broadcast %1 : vector<1x32xf32> to vector<8x32xf32>
    %22 = arith.mulf %20, %21 : vector<8x32xf32>
    %23 = vector.broadcast %2 : vector<1x32xf32> to vector<8x32xf32>
    %24 = arith.addf %22, %23 : vector<8x32xf32>
    %c0_9 = arith.constant 0 : index
    %c0_10 = arith.constant 0 : index
    %25 = vector.load %arg4[%c0_9, %c0_10] : memref<32x96xf32, #tpu.memory_space<vmem>>, vector<32x96xf32>
    %cst_11 = arith.constant dense<0.000000e+00> : vector<8x96xf32>
    %26 = tpu.matmul %24, %25, %cst_11 {dimension_numbers = #tpu.dot_dimension_numbers<[1], [0], [0], [1], [0, 0, 1, 1], [], []>} : vector<8x32xf32>, vector<32x96xf32>, vector<8x96xf32> -> vector<8x96xf32>
    %c0_12 = arith.constant 0 : index
    %c0_13 = arith.constant 0 : index
    %27 = vector.load %arg5[%c0_12, %c0_13] : memref<1x96xf32, #tpu.memory_space<vmem>>, vector<1x96xf32>
    %28 = vector.broadcast %27 : vector<1x96xf32> to vector<8x96xf32>
    %29 = arith.addf %26, %28 : vector<8x96xf32>
    %30 = vector.extract_strided_slice %29 {offsets = [0, 0], sizes = [8, 32], strides = [1, 1]} : vector<8x96xf32> to vector<8x32xf32>
    %31 = vector.extract_strided_slice %29 {offsets = [0, 32], sizes = [8, 32], strides = [1, 1]} : vector<8x96xf32> to vector<8x32xf32>
    %32 = vector.extract_strided_slice %29 {offsets = [0, 64], sizes = [8, 32], strides = [1, 1]} : vector<8x96xf32> to vector<8x32xf32>
    %33 = tpu.iota {dimensions = array<i32: 0>} : vector<4x32xi32>
    %34 = tpu.iota {dimensions = array<i32: 1>} : vector<4x32xi32>
    %c8_i32 = arith.constant 8 : i32
    %35 = vector.broadcast %c8_i32 : i32 to vector<4x32xi32>
    %36 = arith.muli %33, %35 : vector<4x32xi32>
    %37 = arith.cmpi sge, %34, %36 : vector<4x32xi32>
    %c1_i32 = arith.constant 1 : i32
    %38 = vector.broadcast %c1_i32 : i32 to vector<4x32xi32>
    %39 = arith.addi %33, %38 : vector<4x32xi32>
    %c8_i32_14 = arith.constant 8 : i32
    %40 = vector.broadcast %c8_i32_14 : i32 to vector<4x32xi32>
    %41 = arith.muli %39, %40 : vector<4x32xi32>
    %42 = arith.cmpi slt, %34, %41 : vector<4x32xi32>
    %43 = arith.andi %37, %42 : vector<4x32xi1>
    %44 = vector.shape_cast %43 : vector<4x32xi1> to vector<4x1x32xi1>
    %45 = vector.shape_cast %30 : vector<8x32xf32> to vector<1x8x32xf32>
    %cst_15 = arith.constant 0.000000e+00 : f32
    %46 = vector.shape_cast %44 : vector<4x1x32xi1> to vector<4x1x32xi1>
    %47 = vector.broadcast %46 : vector<4x1x32xi1> to vector<4x8x32xi1>
    %48 = vector.shape_cast %45 : vector<1x8x32xf32> to vector<1x8x32xf32>
    %49 = vector.broadcast %48 : vector<1x8x32xf32> to vector<4x8x32xf32>
    %50 = vector.broadcast %cst_15 : f32 to vector<4x8x32xf32>
    %51 = arith.select %47, %49, %50 : vector<4x8x32xi1>, vector<4x8x32xf32>
    %52 = vector.shape_cast %51 : vector<4x8x32xf32> to vector<32x32xf32>
    %cst_16 = arith.constant dense<0.000000e+00> : vector<32x8xf32>
    %53 = tpu.matmul %52, %31, %cst_16 {dimension_numbers = #tpu.dot_dimension_numbers<[1], [1], [0], [0], [0, 0, 1, 0], [], []>} : vector<32x32xf32>, vector<8x32xf32>, vector<32x8xf32> -> vector<32x8xf32>
    %cst_17 = arith.constant 0.353553385 : f32
    %54 = vector.broadcast %cst_17 : f32 to vector<32x8xf32>
    %55 = arith.mulf %53, %54 : vector<32x8xf32>
    %cst_18 = arith.constant dense<0xFF800000> : vector<32xf32>
    %56 = vector.multi_reduction <maximumf>, %55, %cst_18 [1] : vector<32x8xf32> to vector<32xf32>
    %57 = vector.shape_cast %56 : vector<32xf32> to vector<32x1xf32>
    %58 = vector.broadcast %57 : vector<32x1xf32> to vector<32x8xf32>
    %59 = arith.subf %55, %58 : vector<32x8xf32>
    %60 = math.exp %59 : vector<32x8xf32>
    %cst_19 = arith.constant dense<0.000000e+00> : vector<32xf32>
    %61 = vector.multi_reduction <add>, %60, %cst_19 [1] : vector<32x8xf32> to vector<32xf32>
    %62 = vector.shape_cast %61 : vector<32xf32> to vector<32x1xf32>
    %63 = tpu.reciprocal %62 {approx = true} : vector<32x1xf32> -> vector<32x1xf32>
    %64 = vector.broadcast %63 : vector<32x1xf32> to vector<32x8xf32>
    %65 = arith.mulf %60, %64 : vector<32x8xf32>
    %cst_20 = arith.constant dense<0.000000e+00> : vector<32x32xf32>
    %66 = tpu.matmul %65, %32, %cst_20 {dimension_numbers = #tpu.dot_dimension_numbers<[1], [0], [0], [1], [0, 0, 1, 1], [], []>} : vector<32x8xf32>, vector<8x32xf32>, vector<32x32xf32> -> vector<32x32xf32>
    %67 = vector.shape_cast %66 : vector<32x32xf32> to vector<4x8x32xf32>
    %cst_21 = arith.constant 0.000000e+00 : f32
    %68 = vector.shape_cast %44 : vector<4x1x32xi1> to vector<4x1x32xi1>
    %69 = vector.broadcast %68 : vector<4x1x32xi1> to vector<4x8x32xi1>
    %70 = vector.broadcast %cst_21 : f32 to vector<4x8x32xf32>
    %71 = arith.select %69, %67, %70 : vector<4x8x32xi1>, vector<4x8x32xf32>
    %cst_22 = arith.constant dense<0.000000e+00> : vector<8x32xf32>
    %72 = vector.multi_reduction <add>, %71, %cst_22 [0] : vector<4x8x32xf32> to vector<8x32xf32>
    %c0_23 = arith.constant 0 : index
    %c0_24 = arith.constant 0 : index
    %73 = vector.load %arg6[%c0_23, %c0_24] : memref<32x32xf32, #tpu.memory_space<vmem>>, vector<32x32xf32>
    %cst_25 = arith.constant dense<0.000000e+00> : vector<8x32xf32>
    %74 = tpu.matmul %72, %73, %cst_25 {dimension_numbers = #tpu.dot_dimension_numbers<[1], [0], [0], [1], [0, 0, 1, 1], [], []>} : vector<8x32xf32>, vector<32x32xf32>, vector<8x32xf32> -> vector<8x32xf32>
    %c0_26 = arith.constant 0 : index
    %c0_27 = arith.constant 0 : index
    %75 = vector.load %arg7[%c0_26, %c0_27] : memref<1x32xf32, #tpu.memory_space<vmem>>, vector<1x32xf32>
    %76 = vector.broadcast %75 : vector<1x32xf32> to vector<8x32xf32>
    %77 = arith.addf %74, %76 : vector<8x32xf32>
    %78 = arith.addf %0, %77 : vector<8x32xf32>
    %c0_28 = arith.constant 0 : index
    %c0_29 = arith.constant 0 : index
    %79 = vector.load %arg8[%c0_28, %c0_29] : memref<1x32xf32, #tpu.memory_space<vmem>>, vector<1x32xf32>
    %c0_30 = arith.constant 0 : index
    %c0_31 = arith.constant 0 : index
    %80 = vector.load %arg9[%c0_30, %c0_31] : memref<1x32xf32, #tpu.memory_space<vmem>>, vector<1x32xf32>
    %cst_32 = arith.constant dense<0.000000e+00> : vector<8xf32>
    %81 = vector.multi_reduction <add>, %78, %cst_32 [1] : vector<8x32xf32> to vector<8xf32>
    %82 = vector.shape_cast %81 : vector<8xf32> to vector<8x1xf32>
    %cst_33 = arith.constant 3.200000e+01 : f32
    %83 = vector.broadcast %cst_33 : f32 to vector<8x1xf32>
    %84 = arith.divf %82, %83 : vector<8x1xf32>
    %85 = vector.broadcast %84 : vector<8x1xf32> to vector<8x32xf32>
    %86 = arith.subf %78, %85 : vector<8x32xf32>
    %87 = arith.mulf %86, %86 : vector<8x32xf32>
    %cst_34 = arith.constant dense<0.000000e+00> : vector<8xf32>
    %88 = vector.multi_reduction <add>, %87, %cst_34 [1] : vector<8x32xf32> to vector<8xf32>
    %89 = vector.shape_cast %88 : vector<8xf32> to vector<8x1xf32>
    %cst_35 = arith.constant 3.200000e+01 : f32
    %90 = vector.broadcast %cst_35 : f32 to vector<8x1xf32>
    %91 = arith.divf %89, %90 : vector<8x1xf32>
    %92 = vector.broadcast %84 : vector<8x1xf32> to vector<8x32xf32>
    %93 = arith.subf %78, %92 : vector<8x32xf32>
    %cst_36 = arith.constant 9.99999974E-6 : f32
    %94 = vector.broadcast %cst_36 : f32 to vector<8x1xf32>
    %95 = arith.addf %91, %94 : vector<8x1xf32>
    %96 = math.rsqrt %95 : vector<8x1xf32>
    %97 = vector.broadcast %96 : vector<8x1xf32> to vector<8x32xf32>
    %98 = arith.mulf %93, %97 : vector<8x32xf32>
    %99 = vector.broadcast %79 : vector<1x32xf32> to vector<8x32xf32>
    %100 = arith.mulf %98, %99 : vector<8x32xf32>
    %101 = vector.broadcast %80 : vector<1x32xf32> to vector<8x32xf32>
    %102 = arith.addf %100, %101 : vector<8x32xf32>
    %c0_37 = arith.constant 0 : index
    %c0_38 = arith.constant 0 : index
    %103 = vector.load %arg10[%c0_37, %c0_38] : memref<32x4xf32, #tpu.memory_space<vmem>>, vector<32x4xf32>
    %cst_39 = arith.constant dense<0.000000e+00> : vector<8x4xf32>
    %104 = tpu.matmul %102, %103, %cst_39 {dimension_numbers = #tpu.dot_dimension_numbers<[1], [0], [0], [1], [0, 0, 1, 1], [], []>} : vector<8x32xf32>, vector<32x4xf32>, vector<8x4xf32> -> vector<8x4xf32>
    %c0_40 = arith.constant 0 : index
    %c0_41 = arith.constant 0 : index
    %105 = vector.load %arg11[%c0_40, %c0_41] : memref<1x4xf32, #tpu.memory_space<vmem>>, vector<1x4xf32>
    %106 = vector.broadcast %105 : vector<1x4xf32> to vector<8x4xf32>
    %107 = arith.addf %104, %106 : vector<8x4xf32>
    %cst_42 = arith.constant dense<0xFF800000> : vector<8xf32>
    %108 = vector.multi_reduction <maximumf>, %107, %cst_42 [1] : vector<8x4xf32> to vector<8xf32>
    %109 = vector.shape_cast %108 : vector<8xf32> to vector<8x1xf32>
    %110 = tpu.iota {dimensions = array<i32: 1>} : vector<8x4xi32>
    %111 = vector.broadcast %109 : vector<8x1xf32> to vector<8x4xf32>
    %112 = arith.cmpf oeq, %107, %111 : vector<8x4xf32>
    %c4_i32 = arith.constant 4 : i32
    %113 = vector.broadcast %c4_i32 : i32 to vector<8x4xi32>
    %114 = arith.select %112, %110, %113 : vector<8x4xi1>, vector<8x4xi32>
    %cst_43 = arith.constant dense<2147483647> : vector<8xi32>
    %115 = vector.multi_reduction <minsi>, %114, %cst_43 [1] : vector<8x4xi32> to vector<8xi32>
    %116 = vector.shape_cast %115 : vector<8xi32> to vector<8x1xi32>
    %117 = vector.broadcast %116 : vector<8x1xi32> to vector<8x4xi32>
    %118 = arith.cmpi eq, %110, %117 : vector<8x4xi32>
    %119 = arith.extui %118 : vector<8x4xi1> to vector<8x4xi32>
    %120 = arith.sitofp %119 : vector<8x4xi32> to vector<8x4xf32>
    %c0_44 = arith.constant 0 : index
    %c0_45 = arith.constant 0 : index
    %121 = vector.load %arg17[%c0_44, %c0_45] : memref<8x4xf32, #tpu.memory_space<vmem>>, vector<8x4xf32>
    tpu.vector_store %arg17[%c0_44, %c0_45], %120 {strides = array<i32>} : memref<8x4xf32, #tpu.memory_space<vmem>>, vector<8x4xf32>,
    %c0_46 = arith.constant 0 : index
    %c0_47 = arith.constant 0 : index
    %122 = vector.load %arg12[%c0_46, %c0_47] : memref<32x256xf32, #tpu.memory_space<vmem>>, vector<32x256xf32>
    %cst_48 = arith.constant dense<0.000000e+00> : vector<8x256xf32>
    %123 = tpu.matmul %102, %122, %cst_48 {dimension_numbers = #tpu.dot_dimension_numbers<[1], [0], [0], [1], [0, 0, 1, 1], [], []>} : vector<8x32xf32>, vector<32x256xf32>, vector<8x256xf32> -> vector<8x256xf32>
    %c0_49 = arith.constant 0 : index
    %c0_50 = arith.constant 0 : index
    %124 = vector.load %arg13[%c0_49, %c0_50] : memref<1x256xf32, #tpu.memory_space<vmem>>, vector<1x256xf32>
    %125 = vector.broadcast %124 : vector<1x256xf32> to vector<8x256xf32>
    %126 = arith.addf %123, %125 : vector<8x256xf32>
    %cst_51 = arith.constant 0.000000e+00 : f32
    %127 = vector.broadcast %cst_51 : f32 to vector<8x256xf32>
    %128 = arith.maximumf %126, %127 : vector<8x256xf32>
    %129 = tpu.iota {dimensions = array<i32: 1>} : vector<8x256xi32>
    %c64_i32 = arith.constant 64 : i32
    %130 = vector.broadcast %c64_i32 : i32 to vector<8x1xi32>
    %131 = arith.muli %116, %130 : vector<8x1xi32>
    %132 = vector.broadcast %131 : vector<8x1xi32> to vector<8x256xi32>
    %133 = arith.cmpi sge, %129, %132 : vector<8x256xi32>
    %c64_i32_52 = arith.constant 64 : i32
    %134 = vector.broadcast %c64_i32_52 : i32 to vector<8x1xi32>
    %135 = arith.addi %131, %134 : vector<8x1xi32>
    %136 = vector.broadcast %135 : vector<8x1xi32> to vector<8x256xi32>
    %137 = arith.cmpi slt, %129, %136 : vector<8x256xi32>
    %138 = arith.andi %133, %137 : vector<8x256xi1>
    %cst_53 = arith.constant 0.000000e+00 : f32
    %139 = vector.broadcast %cst_53 : f32 to vector<8x256xf32>
    %140 = arith.select %138, %128, %139 : vector<8x256xi1>, vector<8x256xf32>
    %c0_54 = arith.constant 0 : index
    %c0_55 = arith.constant 0 : index
    %141 = vector.load %arg14[%c0_54, %c0_55] : memref<256x32xf32, #tpu.memory_space<vmem>>, vector<256x32xf32>
    %cst_56 = arith.constant dense<0.000000e+00> : vector<8x32xf32>
    %142 = tpu.matmul %140, %141, %cst_56 {dimension_numbers = #tpu.dot_dimension_numbers<[1], [0], [0], [1], [0, 0, 1, 1], [], []>} : vector<8x256xf32>, vector<256x32xf32>, vector<8x32xf32> -> vector<8x32xf32>
    %c0_57 = arith.constant 0 : index
    %c0_58 = arith.constant 0 : index
    %143 = vector.load %arg15[%c0_57, %c0_58] : memref<4x32xf32, #tpu.memory_space<vmem>>, vector<4x32xf32>
    %cst_59 = arith.constant dense<0.000000e+00> : vector<8x32xf32>
    %144 = tpu.matmul %120, %143, %cst_59 {dimension_numbers = #tpu.dot_dimension_numbers<[1], [0], [0], [1], [0, 0, 1, 1], [], []>} : vector<8x4xf32>, vector<4x32xf32>, vector<8x32xf32> -> vector<8x32xf32>
    %145 = arith.addf %142, %144 : vector<8x32xf32>
    %146 = arith.addf %78, %145 : vector<8x32xf32>
    %c0_60 = arith.constant 0 : index
    %c0_61 = arith.constant 0 : index
    %147 = vector.load %arg16[%c0_60, %c0_61] : memref<8x32xf32, #tpu.memory_space<vmem>>, vector<8x32xf32>
    tpu.vector_store %arg16[%c0_60, %c0_61], %146 {strides = array<i32>} : memref<8x32xf32, #tpu.memory_space<vmem>>, vector<8x32xf32>,
    return
  }
  func.func @transform_0(%arg0: i32) -> (i32, i32) {
    %c0_i32 = arith.constant 0 : i32
    %c0_i32_0 = arith.constant 0 : i32
    return %arg0, %c0_i32 : i32, i32
  }
  func.func @transform_1(%arg0: i32) -> (i32, i32) {
    %c0_i32 = arith.constant 0 : i32
    %c0_i32_0 = arith.constant 0 : i32
    %c0_i32_1 = arith.constant 0 : i32
    return %c0_i32, %c0_i32_0 : i32, i32
  }
  func.func @transform_2(%arg0: i32) -> (i32, i32) {
    %c0_i32 = arith.constant 0 : i32
    %c0_i32_0 = arith.constant 0 : i32
    %c0_i32_1 = arith.constant 0 : i32
    return %c0_i32, %c0_i32_0 : i32, i32
  }
  func.func @transform_3(%arg0: i32) -> (i32, i32) {
    %c0_i32 = arith.constant 0 : i32
    %c0_i32_0 = arith.constant 0 : i32
    %c0_i32_1 = arith.constant 0 : i32
    return %c0_i32, %c0_i32_0 : i32, i32
  }
  func.func @transform_4(%arg0: i32) -> (i32, i32) {
    %c0_i32 = arith.constant 0 : i32
    %c0_i32_0 = arith.constant 0 : i32
    %c0_i32_1 = arith.constant 0 : i32
    return %c0_i32, %c0_i32_0 : i32, i32
  }
  func.func @transform_5(%arg0: i32) -> (i32, i32) {
    %c0_i32 = arith.constant 0 : i32
    %c0_i32_0 = arith.constant 0 : i32
    %c0_i32_1 = arith.constant 0 : i32
    return %c0_i32, %c0_i32_0 : i32, i32
  }
  func.func @transform_6(%arg0: i32) -> (i32, i32) {
    %c0_i32 = arith.constant 0 : i32
    %c0_i32_0 = arith.constant 0 : i32
    %c0_i32_1 = arith.constant 0 : i32
    return %c0_i32, %c0_i32_0 : i32, i32
  }
  func.func @transform_7(%arg0: i32) -> (i32, i32) {
    %c0_i32 = arith.constant 0 : i32
    %c0_i32_0 = arith.constant 0 : i32
    %c0_i32_1 = arith.constant 0 : i32
    return %c0_i32, %c0_i32_0 : i32, i32
  }
  func.func @transform_8(%arg0: i32) -> (i32, i32) {
    %c0_i32 = arith.constant 0 : i32
    %c0_i32_0 = arith.constant 0 : i32
    %c0_i32_1 = arith.constant 0 : i32
    return %c0_i32, %c0_i32_0 : i32, i32
  }
  func.func @transform_9(%arg0: i32) -> (i32, i32) {
    %c0_i32 = arith.constant 0 : i32
    %c0_i32_0 = arith.constant 0 : i32
    %c0_i32_1 = arith.constant 0 : i32
    return %c0_i32, %c0_i32_0 : i32, i32
  }
  func.func @transform_10(%arg0: i32) -> (i32, i32) {
    %c0_i32 = arith.constant 0 : i32
    %c0_i32_0 = arith.constant 0 : i32
    %c0_i32_1 = arith.constant 0 : i32
    return %c0_i32, %c0_i32_0 : i32, i32
  }
  func.func @transform_11(%arg0: i32) -> (i32, i32) {
    %c0_i32 = arith.constant 0 : i32
    %c0_i32_0 = arith.constant 0 : i32
    %c0_i32_1 = arith.constant 0 : i32
    return %c0_i32, %c0_i32_0 : i32, i32
  }
  func.func @transform_12(%arg0: i32) -> (i32, i32) {
    %c0_i32 = arith.constant 0 : i32
    %c0_i32_0 = arith.constant 0 : i32
    %c0_i32_1 = arith.constant 0 : i32
    return %c0_i32, %c0_i32_0 : i32, i32
  }
  func.func @transform_13(%arg0: i32) -> (i32, i32) {
    %c0_i32 = arith.constant 0 : i32
    %c0_i32_0 = arith.constant 0 : i32
    %c0_i32_1 = arith.constant 0 : i32
    return %c0_i32, %c0_i32_0 : i32, i32
  }
  func.func @transform_14(%arg0: i32) -> (i32, i32) {
    %c0_i32 = arith.constant 0 : i32
    %c0_i32_0 = arith.constant 0 : i32
    %c0_i32_1 = arith.constant 0 : i32
    return %c0_i32, %c0_i32_0 : i32, i32
  }
  func.func @transform_15(%arg0: i32) -> (i32, i32) {
    %c0_i32 = arith.constant 0 : i32
    %c0_i32_0 = arith.constant 0 : i32
    return %arg0, %c0_i32 : i32, i32
  }
  func.func @transform_16(%arg0: i32) -> (i32, i32) {
    %c0_i32 = arith.constant 0 : i32
    %c0_i32_0 = arith.constant 0 : i32
    return %arg0, %c0_i32 : i32, i32
  }
}

</mosaic_0001>

<llo_original>
// kernel: tpu_custom_call.1
$region0: #{tpu_custom_call.1}
  #allocation0 [shape = 'u32[]', space=smem, size = 0x4, offset = 0x4, fixed_abs, tag = 'smem constant byte address 0x4 - core index']
  #allocation1 [shape = 'u32[144,128]{1,0:T(1,128)}', space=vmem, size = 0x12000, scoped, tag = 'internal scratch']
  %s0 = inlined_call_operand.vmem [shape: f32[16,32], index: 0, kind: input, shape index: {}]
  %s1 = inlined_call_operand.vmem [shape: f32[1,32], index: 1, kind: input, shape index: {}]
  %s2 = inlined_call_operand.vmem [shape: f32[1,32], index: 2, kind: input, shape index: {}]
  %s3 = inlined_call_operand.vmem [shape: f32[32,96], index: 3, kind: input, shape index: {}]
  %s4 = inlined_call_operand.vmem [shape: f32[1,96], index: 4, kind: input, shape index: {}]
  %s5 = inlined_call_operand.vmem [shape: f32[32,32], index: 5, kind: input, shape index: {}]
  %s6 = inlined_call_operand.vmem [shape: f32[1,32], index: 6, kind: input, shape index: {}]
  %s7 = inlined_call_operand.vmem [shape: f32[1,32], index: 7, kind: input, shape index: {}]
  %s8 = inlined_call_operand.vmem [shape: f32[1,32], index: 8, kind: input, shape index: {}]
  %s9 = inlined_call_operand.vmem [shape: f32[32,4], index: 9, kind: input, shape index: {}]
  %s10 = inlined_call_operand.vmem [shape: f32[1,4], index: 10, kind: input, shape index: {}]
  %s11 = inlined_call_operand.vmem [shape: f32[32,256], index: 11, kind: input, shape index: {}]
  %s12 = inlined_call_operand.vmem [shape: f32[1,256], index: 12, kind: input, shape index: {}]
  %s13 = inlined_call_operand.vmem [shape: f32[256,32], index: 13, kind: input, shape index: {}]
  %s14 = inlined_call_operand.vmem [shape: f32[4,32], index: 14, kind: input, shape index: {}]
  %s15 = inlined_call_operand.hbm [shape: f32[16,32], index: 15, kind: output, shape index: {0}]
  %s16 = inlined_call_operand.vmem [shape: f32[16,4], index: 16, kind: output, shape index: {1}]
  %17 = xla_tuple %s15, %s16
  %s18 = sld [smem:[#allocation0]]
  $region101: #{tpu_custom_call.1} parent=0
    _
  %s20 = ssub.s32 1, %s18
  %s21 = scalar_select 0, %s20, %s18
  $region1: #{tpu_custom_call.1} parent=0
    #allocation2 [shape = 'u8[8192]{0}', space=vmem, size = 0x2000, scoped, tag = 'output window, operand 0']
    #allocation3 [shape = 's32[2]{0}', space=sflag, size = 0x8, scoped, tag = 'scoped memory for tpu_custom_call.1']
    %22 = vsyncpa [#allocation3], 0
    %s23 = scalar_lea.sflag [#allocation3], 1
    %24 = vsyncpa %s23, 0
    loop: start=0, step=1, limit=4
    $region2: #{tpu_custom_call.1} parent=1 // loop_pre_header
      _
    $region3: #{tpu_custom_call.1} parent=1 // loop_header
      %s26 = sphi 0, %s30
      %p27 = scmp.ge.s32.totalorder %s26, 4
      %s36 = sphi 0, %s38
      %s39 = sphi 0, %s36
      %s40 = sphi 0, %s39
      %s56 = sphi 0, %s40
      %s60 = sphi 0, %s60
      %s62 = sphi 0, %s60
      %s63 = sphi 0, %s62
      %s77 = sphi 0, %s63
      %s81 = sphi 0, %s81
      %s83 = sphi 0, %s81
      %s84 = sphi 0, %s83
      %s98 = sphi 0, %s84
      %s102 = sphi 0, %s102
      %s104 = sphi 0, %s102
      %s105 = sphi 0, %s104
      %s119 = sphi 0, %s105
      %s123 = sphi 0, %s123
      %s125 = sphi 0, %s123
      %s126 = sphi 0, %s125
      %s140 = sphi 0, %s126
      %s144 = sphi 0, %s144
      %s146 = sphi 0, %s144
      %s147 = sphi 0, %s146
      %s161 = sphi 0, %s147
      %s165 = sphi 0, %s165
      %s167 = sphi 0, %s165
      %s168 = sphi 0, %s167
      %s182 = sphi 0, %s168
      %s186 = sphi 0, %s186
      %s188 = sphi 0, %s186
      %s189 = sphi 0, %s188
      %s203 = sphi 0, %s189
      %s207 = sphi 0, %s207
      %s209 = sphi 0, %s207
      %s210 = sphi 0, %s209
      %s224 = sphi 0, %s210
      %s228 = sphi 0, %s228
      %s230 = sphi 0, %s228
      %s231 = sphi 0, %s230
      %s245 = sphi 0, %s231
      %s249 = sphi 0, %s249
      %s251 = sphi 0, %s249
      %s252 = sphi 0, %s251
      %s266 = sphi 0, %s252
      %s270 = sphi 0, %s270
      %s272 = sphi 0, %s270
      %s273 = sphi 0, %s272
      %s287 = sphi 0, %s273
      %s291 = sphi 0, %s291
      %s293 = sphi 0, %s291
      %s294 = sphi 0, %s293
      %s308 = sphi 0, %s294
      %s312 = sphi 0, %s312
      %s314 = sphi 0, %s312
      %s315 = sphi 0, %s314
      %s329 = sphi 0, %s315
      %s333 = sphi 0, %s333
      %s335 = sphi 0, %s333
      %s336 = sphi 0, %s335
      %s350 = sphi 0, %s336
      %s356 = sphi 0, %s358
      %s359 = sphi 0, %s356
      %s360 = sphi 0, %s359
      %s376 = sphi 0, %s360
      %s382 = sphi 0, %s384
      %s385 = sphi 0, %s382
      %s386 = sphi 0, %s385
      %s402 = sphi 0, %s386
    $region4: #{tpu_custom_call.1} parent=1 // loop_header_branch
      %29 = sbr.rel (%p27) target = $region8
    $region5: #{tpu_custom_call.1} parent=1 // loop_body
      %s31 = ssub.s32 %s26, 1
      %s32 = ssub.s32 %s26, 2
      %s33 = sadd.s32 %s26, 1
      %s34 = ssub.s32 %s26, %s33
      %p35 = scmp.eq.s32.totalorder %s34, 0
      %s37 = sadd.s32 %s36, 1
      %s38 = scalar_select %p35, %s36, %s37
      %p41 = pneg %p35
      %p42 = scmp.eq.s32.totalorder %s26, 1
      %p43 = por %p41, %p42
      %p44 = scmp.ne.s32.totalorder %s36, %s39
      %p45 = scmp.eq.s32.totalorder %s26, 0
      %p46 = por %p44, %p45
      %p47 = scmp.ne.s32.totalorder %s36, %s39
      %p48 = scmp.eq.s32.totalorder %s31, 1
      %p49 = por %p47, %p48
      %p50 = scmp.ne.s32.totalorder %s39, %s40
      %p51 = scmp.eq.s32.totalorder %s31, 0
      %p52 = por %p50, %p51
      %p53 = scmp.ne.s32.totalorder %s39, %s40
      %p54 = scmp.eq.s32.totalorder %s32, 1
      %p55 = por %p53, %p54
      %p57 = scmp.ne.s32.totalorder %s40, %s56
      %p58 = scmp.eq.s32.totalorder %s32, 0
      %p59 = por %p57, %p58
      %s61 = sadd.s32 %s60, 1
      %p64 = scmp.eq.s32.totalorder %s26, 1
      %p65 = scmp.ne.s32.totalorder %s60, %s62
      %p66 = scmp.eq.s32.totalorder %s26, 0
      %p67 = por %p65, %p66
      %p68 = scmp.ne.s32.totalorder %s60, %s62
      %p69 = scmp.eq.s32.totalorder %s31, 1
      %p70 = por %p68, %p69
      %p71 = scmp.ne.s32.totalorder %s62, %s63
      %p72 = scmp.eq.s32.totalorder %s31, 0
      %p73 = por %p71, %p72
      %p74 = scmp.ne.s32.totalorder %s62, %s63
      %p75 = scmp.eq.s32.totalorder %s32, 1
      %p76 = por %p74, %p75
      %p78 = scmp.ne.s32.totalorder %s63, %s77
      %p79 = scmp.eq.s32.totalorder %s32, 0
      %p80 = por %p78, %p79
      %s82 = sadd.s32 %s81, 1
      %p85 = scmp.eq.s32.totalorder %s26, 1
      %p86 = scmp.ne.s32.totalorder %s81, %s83
      %p87 = scmp.eq.s32.totalorder %s26, 0
      %p88 = por %p86, %p87
      %p89 = scmp.ne.s32.totalorder %s81, %s83
      %p90 = scmp.eq.s32.totalorder %s31, 1
      %p91 = por %p89, %p90
      %p92 = scmp.ne.s32.totalorder %s83, %s84
      %p93 = scmp.eq.s32.totalorder %s31, 0
      %p94 = por %p92, %p93
      %p95 = scmp.ne.s32.totalorder %s83, %s84
      %p96 = scmp.eq.s32.totalorder %s32, 1
      %p97 = por %p95, %p96
      %p99 = scmp.ne.s32.totalorder %s84, %s98
      %p100 = scmp.eq.s32.totalorder %s32, 0
      %p101 = por %p99, %p100
      %s103 = sadd.s32 %s102, 1
      %p106 = scmp.eq.s32.totalorder %s26, 1
      %p107 = scmp.ne.s32.totalorder %s102, %s104
      %p108 = scmp.eq.s32.totalorder %s26, 0
      %p109 = por %p107, %p108
      %p110 = scmp.ne.s32.totalorder %s102, %s104
      %p111 = scmp.eq.s32.totalorder %s31, 1
      %p112 = por %p110, %p111
      %p113 = scmp.ne.s32.totalorder %s104, %s105
      %p114 = scmp.eq.s32.totalorder %s31, 0
      %p115 = por %p113, %p114
      %p116 = scmp.ne.s32.totalorder %s104, %s105
      %p117 = scmp.eq.s32.totalorder %s32, 1
      %p118 = por %p116, %p117
      %p120 = scmp.ne.s32.totalorder %s105, %s119
      %p121 = scmp.eq.s32.totalorder %s32, 0
      %p122 = por %p120, %p121
      %s124 = sadd.s32 %s123, 1
      %p127 = scmp.eq.s32.totalorder %s26, 1
      %p128 = scmp.ne.s32.totalorder %s123, %s125
      %p129 = scmp.eq.s32.totalorder %s26, 0
      %p130 = por %p128, %p129
      %p131 = scmp.ne.s32.totalorder %s123, %s125
      %p132 = scmp.eq.s32.totalorder %s31, 1
      %p133 = por %p131, %p132
      %p134 = scmp.ne.s32.totalorder %s125, %s126
      %p135 = scmp.eq.s32.totalorder %s31, 0
      %p136 = por %p134, %p135
      %p137 = scmp.ne.s32.totalorder %s125, %s126
      %p138 = scmp.eq.s32.totalorder %s32, 1
      %p139 = por %p137, %p138
      %p141 = scmp.ne.s32.totalorder %s126, %s140
      %p142 = scmp.eq.s32.totalorder %s32, 0
      %p143 = por %p141, %p142
      %s145 = sadd.s32 %s144, 1
      %p148 = scmp.eq.s32.totalorder %s26, 1
      %p149 = scmp.ne.s32.totalorder %s144, %s146
      %p150 = scmp.eq.s32.totalorder %s26, 0
      %p151 = por %p149, %p150
      %p152 = scmp.ne.s32.totalorder %s144, %s146
      %p153 = scmp.eq.s32.totalorder %s31, 1
      %p154 = por %p152, %p153
      %p155 = scmp.ne.s32.totalorder %s146, %s147
      %p156 = scmp.eq.s32.totalorder %s31, 0
      %p157 = por %p155, %p156
      %p158 = scmp.ne.s32.totalorder %s146, %s147
      %p159 = scmp.eq.s32.totalorder %s32, 1
      %p160 = por %p158, %p159
      %p162 = scmp.ne.s32.totalorder %s147, %s161
      %p163 = scmp.eq.s32.totalorder %s32, 0
      %p164 = por %p162, %p163
      %s166 = sadd.s32 %s165, 1
      %p169 = scmp.eq.s32.totalorder %s26, 1
      %p170 = scmp.ne.s32.totalorder %s165, %s167
      %p171 = scmp.eq.s32.totalorder %s26, 0
      %p172 = por %p170, %p171
      %p173 = scmp.ne.s32.totalorder %s165, %s167
      %p174 = scmp.eq.s32.totalorder %s31, 1
      %p175 = por %p173, %p174
      %p176 = scmp.ne.s32.totalorder %s167, %s168
      %p177 = scmp.eq.s32.totalorder %s31, 0
      %p178 = por %p176, %p177
      %p179 = scmp.ne.s32.totalorder %s167, %s168
      %p180 = scmp.eq.s32.totalorder %s32, 1
      %p181 = por %p179, %p180
      %p183 = scmp.ne.s32.totalorder %s168, %s182
      %p184 = scmp.eq.s32.totalorder %s32, 0
      %p185 = por %p183, %p184
      %s187 = sadd.s32 %s186, 1
      %p190 = scmp.eq.s32.totalorder %s26, 1
      %p191 = scmp.ne.s32.totalorder %s186, %s188
      %p192 = scmp.eq.s32.totalorder %s26, 0
      %p193 = por %p191, %p192
      %p194 = scmp.ne.s32.totalorder %s186, %s188
      %p195 = scmp.eq.s32.totalorder %s31, 1
      %p196 = por %p194, %p195
      %p197 = scmp.ne.s32.totalorder %s188, %s189
      %p198 = scmp.eq.s32.totalorder %s31, 0
      %p199 = por %p197, %p198
      %p200 = scmp.ne.s32.totalorder %s188, %s189
      %p201 = scmp.eq.s32.totalorder %s32, 1
      %p202 = por %p200, %p201
      %p204 = scmp.ne.s32.totalorder %s189, %s203
      %p205 = scmp.eq.s32.totalorder %s32, 0
      %p206 = por %p204, %p205
      %s208 = sadd.s32 %s207, 1
      %p211 = scmp.eq.s32.totalorder %s26, 1
      %p212 = scmp.ne.s32.totalorder %s207, %s209
      %p213 = scmp.eq.s32.totalorder %s26, 0
      %p214 = por %p212, %p213
      %p215 = scmp.ne.s32.totalorder %s207, %s209
      %p216 = scmp.eq.s32.totalorder %s31, 1
      %p217 = por %p215, %p216
      %p218 = scmp.ne.s32.totalorder %s209, %s210
      %p219 = scmp.eq.s32.totalorder %s31, 0
      %p220 = por %p218, %p219
      %p221 = scmp.ne.s32.totalorder %s209, %s210
      %p222 = scmp.eq.s32.totalorder %s32, 1
      %p223 = por %p221, %p222
      %p225 = scmp.ne.s32.totalorder %s210, %s224
      %p226 = scmp.eq.s32.totalorder %s32, 0
      %p227 = por %p225, %p226
      %s229 = sadd.s32 %s228, 1
      %p232 = scmp.eq.s32.totalorder %s26, 1
      %p233 = scmp.ne.s32.totalorder %s228, %s230
      %p234 = scmp.eq.s32.totalorder %s26, 0
      %p235 = por %p233, %p234
      %p236 = scmp.ne.s32.totalorder %s228, %s230
      %p237 = scmp.eq.s32.totalorder %s31, 1
      %p238 = por %p236, %p237
      %p239 = scmp.ne.s32.totalorder %s230, %s231
      %p240 = scmp.eq.s32.totalorder %s31, 0
      %p241 = por %p239, %p240
      %p242 = scmp.ne.s32.totalorder %s230, %s231
      %p243 = scmp.eq.s32.totalorder %s32, 1
      %p244 = por %p242, %p243
      %p246 = scmp.ne.s32.totalorder %s231, %s245
      %p247 = scmp.eq.s32.totalorder %s32, 0
      %p248 = por %p246, %p247
      %s250 = sadd.s32 %s249, 1
      %p253 = scmp.eq.s32.totalorder %s26, 1
      %p254 = scmp.ne.s32.totalorder %s249, %s251
      %p255 = scmp.eq.s32.totalorder %s26, 0
      %p256 = por %p254, %p255
      %p257 = scmp.ne.s32.totalorder %s249, %s251
      %p258 = scmp.eq.s32.totalorder %s31, 1
      %p259 = por %p257, %p258
      %p260 = scmp.ne.s32.totalorder %s251, %s252
      %p261 = scmp.eq.s32.totalorder %s31, 0
      %p262 = por %p260, %p261
      %p263 = scmp.ne.s32.totalorder %s251, %s252
      %p264 = scmp.eq.s32.totalorder %s32, 1
      %p265 = por %p263, %p264
      %p267 = scmp.ne.s32.totalorder %s252, %s266
      %p268 = scmp.eq.s32.totalorder %s32, 0
      %p269 = por %p267, %p268
      %s271 = sadd.s32 %s270, 1
      %p274 = scmp.eq.s32.totalorder %s26, 1
      %p275 = scmp.ne.s32.totalorder %s270, %s272
      %p276 = scmp.eq.s32.totalorder %s26, 0
      %p277 = por %p275, %p276
      %p278 = scmp.ne.s32.totalorder %s270, %s272
      %p279 = scmp.eq.s32.totalorder %s31, 1
      %p280 = por %p278, %p279
      %p281 = scmp.ne.s32.totalorder %s272, %s273
      %p282 = scmp.eq.s32.totalorder %s31, 0
      %p283 = por %p281, %p282
      %p284 = scmp.ne.s32.totalorder %s272, %s273
      %p285 = scmp.eq.s32.totalorder %s32, 1
      %p286 = por %p284, %p285
      %p288 = scmp.ne.s32.totalorder %s273, %s287
      %p289 = scmp.eq.s32.totalorder %s32, 0
      %p290 = por %p288, %p289
      %s292 = sadd.s32 %s291, 1
      %p295 = scmp.eq.s32.totalorder %s26, 1
      %p296 = scmp.ne.s32.totalorder %s291, %s293
      %p297 = scmp.eq.s32.totalorder %s26, 0
      %p298 = por %p296, %p297
      %p299 = scmp.ne.s32.totalorder %s291, %s293
      %p300 = scmp.eq.s32.totalorder %s31, 1
      %p301 = por %p299, %p300
      %p302 = scmp.ne.s32.totalorder %s293, %s294
      %p303 = scmp.eq.s32.totalorder %s31, 0
      %p304 = por %p302, %p303
      %p305 = scmp.ne.s32.totalorder %s293, %s294
      %p306 = scmp.eq.s32.totalorder %s32, 1
      %p307 = por %p305, %p306
      %p309 = scmp.ne.s32.totalorder %s294, %s308
      %p310 = scmp.eq.s32.totalorder %s32, 0
      %p311 = por %p309, %p310
      %s313 = sadd.s32 %s312, 1
      %p316 = scmp.eq.s32.totalorder %s26, 1
      %p317 = scmp.ne.s32.totalorder %s312, %s314
      %p318 = scmp.eq.s32.totalorder %s26, 0
      %p319 = por %p317, %p318
      %p320 = scmp.ne.s32.totalorder %s312, %s314
      %p321 = scmp.eq.s32.totalorder %s31, 1
      %p322 = por %p320, %p321
      %p323 = scmp.ne.s32.totalorder %s314, %s315
      %p324 = scmp.eq.s32.totalorder %s31, 0
      %p325 = por %p323, %p324
      %p326 = scmp.ne.s32.totalorder %s314, %s315
      %p327 = scmp.eq.s32.totalorder %s32, 1
      %p328 = por %p326, %p327
      %p330 = scmp.ne.s32.totalorder %s315, %s329
      %p331 = scmp.eq.s32.totalorder %s32, 0
      %p332 = por %p330, %p331
      %s334 = sadd.s32 %s333, 1
      %p337 = scmp.eq.s32.totalorder %s26, 1
      %p338 = scmp.ne.s32.totalorder %s333, %s335
      %p339 = scmp.eq.s32.totalorder %s26, 0
      %p340 = por %p338, %p339
      %p341 = scmp.ne.s32.totalorder %s333, %s335
      %p342 = scmp.eq.s32.totalorder %s31, 1
      %p343 = por %p341, %p342
      %p344 = scmp.ne.s32.totalorder %s335, %s336
      %p345 = scmp.eq.s32.totalorder %s31, 0
      %p346 = por %p344, %p345
      %p347 = scmp.ne.s32.totalorder %s335, %s336
      %p348 = scmp.eq.s32.totalorder %s32, 1
      %p349 = por %p347, %p348
      %p351 = scmp.ne.s32.totalorder %s336, %s350
      %p352 = scmp.eq.s32.totalorder %s32, 0
      %p353 = por %p351, %p352
      %s354 = ssub.s32 %s26, %s33
      %p355 = scmp.eq.s32.totalorder %s354, 0
      %s357 = sadd.s32 %s356, 1
      %s358 = scalar_select %p355, %s356, %s357
      %p361 = pneg %p355
      %p362 = scmp.eq.s32.totalorder %s26, 1
      %p363 = por %p361, %p362
      %p364 = scmp.ne.s32.totalorder %s356, %s359
      %p365 = scmp.eq.s32.totalorder %s26, 0
      %p366 = por %p364, %p365
      %p367 = scmp.ne.s32.totalorder %s356, %s359
      %p368 = scmp.eq.s32.totalorder %s31, 1
      %p369 = por %p367, %p368
      %p370 = scmp.ne.s32.totalorder %s359, %s360
      %p371 = scmp.eq.s32.totalorder %s31, 0
      %p372 = por %p370, %p371
      %p373 = scmp.ne.s32.totalorder %s359, %s360
      %p374 = scmp.eq.s32.totalorder %s32, 1
      %p375 = por %p373, %p374
      %p377 = scmp.ne.s32.totalorder %s360, %s376
      %p378 = scmp.eq.s32.totalorder %s32, 0
      %p379 = por %p377, %p378
      %s380 = ssub.s32 %s26, %s33
      %p381 = scmp.eq.s32.totalorder %s380, 0
      %s383 = sadd.s32 %s382, 1
      %s384 = scalar_select %p381, %s382, %s383
      %p387 = pneg %p381
      %p388 = scmp.eq.s32.totalorder %s26, 1
      %p389 = por %p387, %p388
      %p390 = scmp.ne.s32.totalorder %s382, %s385
      %p391 = scmp.eq.s32.totalorder %s26, 0
      %p392 = por %p390, %p391
      %p393 = scmp.ne.s32.totalorder %s382, %s385
      %p394 = scmp.eq.s32.totalorder %s31, 1
      %p395 = por %p393, %p394
      %p396 = scmp.ne.s32.totalorder %s385, %s386
      %p397 = scmp.eq.s32.totalorder %s31, 0
      %p398 = por %p396, %p397
      %p399 = scmp.ne.s32.totalorder %s385, %s386
      %p400 = scmp.eq.s32.totalorder %s32, 1
      %p401 = por %p399, %p400
      %p403 = scmp.ne.s32.totalorder %s386, %s402
      %p404 = scmp.eq.s32.totalorder %s32, 0
      %p405 = por %p403, %p404
      %p406 = scmp.le.s32.totalorder 1, %s26
      %p407 = scmp.lt.s32.totalorder %s26, 3
      %p408 = pnand %p406, %p407
      %p409 = pneg %p408
      // Predicated region
      $region9: #{tpu_custom_call.1} parent=5 // pred_check
        _
      $region10: #{tpu_custom_call.1} parent=5 // pred_check_branch
        %411 = sbr.rel (%p408) target = $region12
      $region11: #{tpu_custom_call.1} parent=5 // pred_region
        %s412 = ssub.s32 %s26, 1
        // Predicated region
        $region13: #{tpu_custom_call.1} parent=11 // pred_check
          %p413 = pneg %p73
        $region14: #{tpu_custom_call.1} parent=11 // pred_check_branch
          %415 = sbr.rel (%p413) target = $region16
        $region15: #{tpu_custom_call.1} parent=11 // pred_region
          _
        $region16: #{tpu_custom_call.1} parent=11 // pred_fallthru
          _
        // Predicated region
        $region17: #{tpu_custom_call.1} parent=11 // pred_check
          %p416 = pneg %p94
        $region18: #{tpu_custom_call.1} parent=11 // pred_check_branch
          %418 = sbr.rel (%p416) target = $region20
        $region19: #{tpu_custom_call.1} parent=11 // pred_region
          _
        $region20: #{tpu_custom_call.1} parent=11 // pred_fallthru
          _
        // Predicated region
        $region21: #{tpu_custom_call.1} parent=11 // pred_check
          %p419 = pneg %p115
        $region22: #{tpu_custom_call.1} parent=11 // pred_check_branch
          %421 = sbr.rel (%p419) target = $region24
        $region23: #{tpu_custom_call.1} parent=11 // pred_region
          _
        $region24: #{tpu_custom_call.1} parent=11 // pred_fallthru
          _
        // Predicated region
        $region25: #{tpu_custom_call.1} parent=11 // pred_check
          %p422 = pneg %p136
        $region26: #{tpu_custom_call.1} parent=11 // pred_check_branch
          %424 = sbr.rel (%p422) target = $region28
        $region27: #{tpu_custom_call.1} parent=11 // pred_region
          _
        $region28: #{tpu_custom_call.1} parent=11 // pred_fallthru
          _
        // Predicated region
        $region29: #{tpu_custom_call.1} parent=11 // pred_check
          %p425 = pneg %p157
        $region30: #{tpu_custom_call.1} parent=11 // pred_check_branch
          %427 = sbr.rel (%p425) target = $region32
        $region31: #{tpu_custom_call.1} parent=11 // pred_region
          _
        $region32: #{tpu_custom_call.1} parent=11 // pred_fallthru
          _
        // Predicated region
        $region33: #{tpu_custom_call.1} parent=11 // pred_check
          %p428 = pneg %p178
        $region34: #{tpu_custom_call.1} parent=11 // pred_check_branch
          %430 = sbr.rel (%p428) target = $region36
        $region35: #{tpu_custom_call.1} parent=11 // pred_region
          _
        $region36: #{tpu_custom_call.1} parent=11 // pred_fallthru
          _
        // Predicated region
        $region37: #{tpu_custom_call.1} parent=11 // pred_check
          %p431 = pneg %p199
        $region38: #{tpu_custom_call.1} parent=11 // pred_check_branch
          %433 = sbr.rel (%p431) target = $region40
        $region39: #{tpu_custom_call.1} parent=11 // pred_region
          _
        $region40: #{tpu_custom_call.1} parent=11 // pred_fallthru
          _
        // Predicated region
        $region41: #{tpu_custom_call.1} parent=11 // pred_check
          %p434 = pneg %p220
        $region42: #{tpu_custom_call.1} parent=11 // pred_check_branch
          %436 = sbr.rel (%p434) target = $region44
        $region43: #{tpu_custom_call.1} parent=11 // pred_region
          _
        $region44: #{tpu_custom_call.1} parent=11 // pred_fallthru
          _
        // Predicated region
        $region45: #{tpu_custom_call.1} parent=11 // pred_check
          %p437 = pneg %p241
        $region46: #{tpu_custom_call.1} parent=11 // pred_check_branch
          %439 = sbr.rel (%p437) target = $region48
        $region47: #{tpu_custom_call.1} parent=11 // pred_region
          _
        $region48: #{tpu_custom_call.1} parent=11 // pred_fallthru
          _
        // Predicated region
        $region49: #{tpu_custom_call.1} parent=11 // pred_check
          %p440 = pneg %p262
        $region50: #{tpu_custom_call.1} parent=11 // pred_check_branch
          %442 = sbr.rel (%p440) target = $region52
        $region51: #{tpu_custom_call.1} parent=11 // pred_region
          _
        $region52: #{tpu_custom_call.1} parent=11 // pred_fallthru
          _
        // Predicated region
        $region53: #{tpu_custom_call.1} parent=11 // pred_check
          %p443 = pneg %p283
        $region54: #{tpu_custom_call.1} parent=11 // pred_check_branch
          %445 = sbr.rel (%p443) target = $region56
        $region55: #{tpu_custom_call.1} parent=11 // pred_region
          _
        $region56: #{tpu_custom_call.1} parent=11 // pred_fallthru
          _
        // Predicated region
        $region57: #{tpu_custom_call.1} parent=11 // pred_check
          %p446 = pneg %p304
        $region58: #{tpu_custom_call.1} parent=11 // pred_check_branch
          %448 = sbr.rel (%p446) target = $region60
        $region59: #{tpu_custom_call.1} parent=11 // pred_region
          _
        $region60: #{tpu_custom_call.1} parent=11 // pred_fallthru
          _
        // Predicated region
        $region61: #{tpu_custom_call.1} parent=11 // pred_check
          %p449 = pneg %p325
        $region62: #{tpu_custom_call.1} parent=11 // pred_check_branch
          %451 = sbr.rel (%p449) target = $region64
        $region63: #{tpu_custom_call.1} parent=11 // pred_region
          _
        $region64: #{tpu_custom_call.1} parent=11 // pred_fallthru
          _
        // Predicated region
        $region65: #{tpu_custom_call.1} parent=11 // pred_check
          %p452 = pneg %p346
        $region66: #{tpu_custom_call.1} parent=11 // pred_check_branch
          %454 = sbr.rel (%p452) target = $region68
        $region67: #{tpu_custom_call.1} parent=11 // pred_region
          _
        $region68: #{tpu_custom_call.1} parent=11 // pred_fallthru
          _
      $region12: #{tpu_custom_call.1} parent=5 // pred_fallthru
        _
      %p455 = scmp.lt.s32.totalorder %s26, 2
      // Predicated region
      $region69: #{tpu_custom_call.1} parent=5 // pred_check
        %p456 = pneg %p455
      $region70: #{tpu_custom_call.1} parent=5 // pred_check_branch
        %458 = sbr.rel (%p456) target = $region72
      $region71: #{tpu_custom_call.1} parent=5 // pred_region
        // Predicated region
        $region73: #{tpu_custom_call.1} parent=71 // pred_check
          %p459 = pneg %p46
        $region74: #{tpu_custom_call.1} parent=71 // pred_check_branch
          %461 = sbr.rel (%p459) target = $region76
        $region75: #{tpu_custom_call.1} parent=71 // pred_region
          %p462 = scmp.lt.s32.totalorder %s26, 1
          %s463 = scalar_select %p462, %s26, 1
          %s464 = smul.addr %s463, 8
          %s465 = scalar_lea.vmem %s0, %s464
        $region76: #{tpu_custom_call.1} parent=71 // pred_fallthru
          _
      $region72: #{tpu_custom_call.1} parent=5 // pred_fallthru
        _
      %p466 = scmp.le.s32.totalorder 1, %s26
      %p467 = scmp.lt.s32.totalorder %s26, 3
      %p468 = pnand %p466, %p467
      %p469 = pneg %p468
      // Predicated region
      $region77: #{tpu_custom_call.1} parent=5 // pred_check
        _
      $region78: #{tpu_custom_call.1} parent=5 // pred_check_branch
        %471 = sbr.rel (%p468) target = $region80
      $region79: #{tpu_custom_call.1} parent=5 // pred_region
        %s472 = ssub.s32 %s26, 1
        %p473 = scmp.lt.s32.totalorder %s31, 1
        %s474 = scalar_select %p473, %s31, 1
        %s475 = smul.addr %s474, 8
        %s476 = scalar_lea.vmem %s0, %s475
        %p477 = pneg %p52
        %p478 = pneg %p49
        %p479 = pneg %p73
        %p480 = pneg %p70
        %p481 = pneg %p94
        %p482 = pneg %p91
        %p483 = pneg %p115
        %p484 = pneg %p112
        %p485 = pneg %p136
        %p486 = pneg %p133
        %p487 = pneg %p157
        %p488 = pneg %p154
        %p489 = pneg %p178
        %p490 = pneg %p175
        %p491 = pneg %p199
        %p492 = pneg %p196
        %p493 = pneg %p220
        %p494 = pneg %p217
        %p495 = pneg %p241
        %p496 = pneg %p238
        %p497 = pneg %p262
        %p498 = pneg %p259
        %p499 = pneg %p283
        %p500 = pneg %p280
        %p501 = pneg %p304
        %p502 = pneg %p301
        %p503 = pneg %p325
        %p504 = pneg %p322
        %p505 = pneg %p346
        %p506 = pneg %p343
        %p507 = pneg %p372
        %p508 = pneg %p369
        %s509 = sand.u32 %s359, 1
        %s510 = scalar_lea.sflag [#allocation3], %s509
        %s511 = sand.u32 %s359, 1
        %s512 = smul.addr %s511, 8
        %s513 = scalar_lea.vmem [#allocation2], %s512
        %p514 = pneg %p398
        %p515 = pneg %p395
        %p516 = scmp.lt.s32.totalorder %s31, 1
        %s517 = scalar_select %p516, %s31, 1
        %s518 = smul.addr %s517, 8
        %s519 = scalar_lea.vmem %s16, %s518
        %p520 = scmp.lt.s32.totalorder %s31, 1
        %s521 = scalar_select %p520, %s31, 1
        %s522 = smul.addr %s521, 8
        %s523 = scalar_lea.vmem %s0, %s522
        %p524 = scmp.lt.s32.totalorder %s31, 1
        %s525 = scalar_select %p524, %s31, 1
        %s526 = smul.addr %s525, 8
        %s527 = scalar_lea.vmem %s16, %s526
        %v528 = vld [vmem:[%s523] sm:$0xff]
        %v529 = vld [vmem:[%s1] sm:$0x1]
        %v530 = vld [vmem:[%s2] sm:$0x1]
        %vm531 = vcmask 261120
        %v532 = vsel %vm531, %v528, 0.0
        %533 = vadd.xlane.f32.xlu0 %v532
        %v534 = vpop.xlane.xlu0 %533
        %v535 = vrcp.pop 32.0
        %v536 = vmul.f32 %v534, %v535
        %v537 = vsub.f32 %v528, %v536
        %v538 = vmul.f32 %v537, %v537
        %v539 = vsel %vm531, %v538, 0.0
        %540 = vadd.xlane.f32.xlu0 %v539
        %v541 = vpop.xlane.xlu0 %540
        %v542 = vmul.f32 %v541, %v535
        %v543 = vadd.f32 %v542, 1e-05
        %v544 = vrsqrt.pop %v543
        %v545 = vmul.f32 %v537, %v544
        %v547 = vlaneseq
        %v548 = vshrl.u32 %v547, 7
        %v549 = vsub.s32 0, %v548
        %v550 = vrot.slane %v529, %v549
        %v552 = vmul.f32 %v545, %v550
        %v554 = vlaneseq
        %v555 = vshrl.u32 %v554, 7
        %v556 = vsub.s32 0, %v555
        %v557 = vrot.slane %v530, %v556
        %v559 = vadd.f32 %v552, %v557
        %v560 = vld [vmem:[%s3] sm:$0xff]
        %v561 = vld [vmem:[%s3 + $0x8] sm:$0xff]
        %v562 = vld [vmem:[%s3 + $0x10] sm:$0xff]
        %v563 = vld [vmem:[%s3 + $0x18] sm:$0xff]
        %v564 = vld [vmem:[%s4] sm:$0x1]
        %v566 = vlaneseq
        %v567 = vshrl.u32 %v566, 7
        %v568 = vsub.s32 0, %v567
        %v569 = vrot.slane %v564, %v568
        %v572 = vsel %vm531, %v559, 0
        %574 = vmatprep.subr.mxu0 0.0
        %575 = vmatpush1.msra.mxu0 0.0
        %576 = vmatprep.subr.mxu0 0.0
        %577 = vmatpush1.msra.mxu0 0.0
        %578 = vmatprep.subr.mxu0 0.0
        %579 = vmatpush1.msra.mxu0 0.0
        %580 = vmatprep.subr.mxu0 0.0
        %581 = vmatpush1.msra.mxu0 0.0
        %582 = vmatprep.subr.mxu0 0.0
        %583 = vmatpush1.msra.mxu0 0.0
        %584 = vmatprep.subr.mxu0 0.0
        %585 = vmatpush1.msra.mxu0 0.0
        %586 = vmatprep.subr.mxu0 0.0
        %587 = vmatpush1.msra.mxu0 0.0
        %588 = vmatprep.subr.mxu0 0.0
        %589 = vmatpush1.msra.mxu0 0.0
        %590 = vmatprep.subr.mxu0 0.0
        %591 = vmatpush1.msra.mxu0 0.0
        %592 = vmatprep.subr.mxu0 0.0
        %593 = vmatpush1.msra.mxu0 0.0
        %594 = vmatprep.subr.mxu0 0.0
        %595 = vmatpush1.msra.mxu0 0.0
        %596 = vmatprep.subr.mxu0 0.0
        %597 = vmatpush1.msra.mxu0 0.0
        %598 = vmatprep.subr.mxu0 0.0
        %599 = vmatpush1.msra.mxu0 %v563
        %600 = vmatprep.subr.mxu0 0.0
        %601 = vmatpush1.msra.mxu0 %v562
        %602 = vmatprep.subr.mxu0 0.0
        %603 = vmatpush1.msra.mxu0 %v561
        %604 = vmatprep.subr.mxu0 0.0
        %605 = vmatpush1.msra.mxu0 %v560
        %606 = vmatprep.subr.mxu0 0.0
        %607 = vmatpush2.msra.mxu0 0.0
        %608 = vmatprep.subr.mxu0 0.0
        %609 = vmatpush2.msra.mxu0 0.0
        %610 = vmatprep.subr.mxu0 0.0
        %611 = vmatpush2.msra.mxu0 0.0
        %612 = vmatprep.subr.mxu0 0.0
        %613 = vmatpush2.msra.mxu0 0.0
        %614 = vmatprep.subr.mxu0 0.0
        %615 = vmatpush2.msra.mxu0 0.0
        %616 = vmatprep.subr.mxu0 0.0
        %617 = vmatpush2.msra.mxu0 0.0
        %618 = vmatprep.subr.mxu0 0.0
        %619 = vmatpush2.msra.mxu0 0.0
        %620 = vmatprep.subr.mxu0 0.0
        %621 = vmatpush2.msra.mxu0 0.0
        %622 = vmatprep.subr.mxu0 0.0
        %623 = vmatpush2.msra.mxu0 0.0
        %624 = vmatprep.subr.mxu0 0.0
        %625 = vmatpush2.msra.mxu0 0.0
        %626 = vmatprep.subr.mxu0 0.0
        %627 = vmatpush2.msra.mxu0 0.0
        %628 = vmatprep.subr.mxu0 0.0
        %629 = vmatpush2.msra.mxu0 0.0
        %630 = vmatprep.subr.mxu0 0.0
        %631 = vmatpush2.msra.mxu0 0.0
        %632 = vmatprep.subr.mxu0 0.0
        %633 = vmatpush2.msra.mxu0 0.0
        %634 = vmatprep.subr.mxu0 0.0
        %635 = vmatpush2.msra.mxu0 0.0
        %636 = vmatprep.subr.mxu0 0.0
        %637 = vmatpush2.msra.mxu0 0.0
        %638 = vmatprep.mubr.f32.mxu0 0.0
        %639 = vmatmul.mubr.f32.gmra.mxu0 %v572
        %v640 = vpop.f32.mrf.mxu0
        %v641 = vadd.f32 %v569, %v640
        %v642 = vpop.f32.mrf.mxu0
        %643 = vdwg.mxu0
        %v644 = vlaneseq
        %v645 = vshrl.u32 %v644, 7
        %v646 = vlaneseq
        %v647 = vand.u32 %v646, 127
        %v648 = vmul.u32 %v645, 8
        %vm649 = vcmp.ge.s32.totalorder %v647, %v648
        %v650 = vadd.s32 %v645, 1
        %v651 = vmul.u32 %v650, 8
        %vm652 = vcmp.lt.s32.totalorder %v647, %v651
        %vm653 = vmand %vm649, %vm652
        %v654 = vsel %vm653, 1, 0
        %v656 = vunpack.c.l.s4 1966171168
        %v657 = vunpack.c.0.s8 %v656
        %v658 = vlaneseq
        %v659 = vshrl.u32 %v658, 7
        %v660 = vsub.s32 %v657, %v659
        %v661 = vrot.slane %v654, %v660
        %v662 = vcombine.high %v661, %v661
        %v664 = vunpack.c.l.s4 1966171168
        %v665 = vunpack.c.0.s8 %v664
        %v666 = vlaneseq
        %v667 = vshrl.u32 %v666, 7
        %v668 = vsub.s32 %v665, %v667
        %v669 = vrot.slane %v661, %v668
        %v671 = vunpack.c.l.s4 1966171168
        %v672 = vunpack.c.0.s8 %v671
        %v673 = vlaneseq
        %v674 = vshrl.u32 %v673, 7
        %v675 = vsub.s32 %v672, %v674
        %v676 = vrot.slane %v662, %v675
        %v677 = vcombine.high %v669, %v669
        %v678 = vcombine.high %v676, %v676
        %vm679 = vcmp.ne.s32.totalorder %v669, 0
        %vm680 = vcmp.ne.s32.totalorder %v676, 0
        %vm681 = vcmp.ne.s32.totalorder %v677, 0
        %vm682 = vcmp.ne.s32.totalorder %v678, 0
        %v683 = vsel %vm679, 1, 0
        %v684 = vsel %vm680, 1, 0
        %v685 = vsel %vm681, 1, 0
        %v686 = vsel %vm682, 1, 0
        %v687 = vlaneseq
        %v688 = vshrl.u32 %v687, 7
        %v689 = vsub.s32 0, %v688
        %v690 = vrot.slane %v683, %v689
        %v691 = vlaneseq
        %v692 = vshrl.u32 %v691, 7
        %v693 = vsub.s32 0, %v692
        %v694 = vrot.slane %v684, %v693
        %v695 = vlaneseq
        %v696 = vshrl.u32 %v695, 7
        %v697 = vsub.s32 0, %v696
        %v698 = vrot.slane %v685, %v697
        %v699 = vlaneseq
        %v700 = vshrl.u32 %v699, 7
        %v701 = vsub.s32 0, %v700
        %v702 = vrot.slane %v686, %v701
        %vm703 = vcmp.eq.s32.totalorder %v690, 1
        %vm704 = vcmp.eq.s32.totalorder %v694, 1
        %vm705 = vcmp.eq.s32.totalorder %v698, 1
        %vm706 = vcmp.eq.s32.totalorder %v702, 1
        %v707 = vsel %vm703, %v641, 0.0
        %v708 = vsel %vm704, %v641, 0.0
        %v709 = vsel %vm705, %v641, 0.0
        %v710 = vsel %vm706, %v641, 0.0
        %712 = vrot.lane.b32.xlu0 %v641, 96
        %v713 = vpop.permute.xlu0 %712
        %v715 = vsel %vm531, %v707, 0
        %v718 = vsel %vm531, %v708, 0
        %v721 = vsel %vm531, %v709, 0
        %v724 = vsel %vm531, %v710, 0
        %v726 = vsel %vm531, %v713, 0
        %728 = vmatprep.subr.mxu0 0.0
        %729 = vmatpush1.xpose.msra.mxu0 0.0
        %730 = vmatprep.subr.mxu0 0.0
        %731 = vmatpush1.xpose.msra.mxu0 0.0
        %732 = vmatprep.subr.mxu0 0.0
        %733 = vmatpush1.xpose.msra.mxu0 0.0
        %734 = vmatprep.subr.mxu0 0.0
        %735 = vmatpush1.xpose.msra.mxu0 0.0
        %736 = vmatprep.subr.mxu0 0.0
        %737 = vmatpush1.xpose.msra.mxu0 0.0
        %738 = vmatprep.subr.mxu0 0.0
        %739 = vmatpush1.xpose.msra.mxu0 0.0
        %740 = vmatprep.subr.mxu0 0.0
        %741 = vmatpush1.xpose.msra.mxu0 0.0
        %742 = vmatprep.subr.mxu0 0.0
        %743 = vmatpush1.xpose.msra.mxu0 0.0
        %744 = vmatprep.subr.mxu0 0.0
        %745 = vmatpush1.xpose.msra.mxu0 0.0
        %746 = vmatprep.subr.mxu0 0.0
        %747 = vmatpush1.xpose.msra.mxu0 0.0
        %748 = vmatprep.subr.mxu0 0.0
        %749 = vmatpush1.xpose.msra.mxu0 0.0
        %750 = vmatprep.subr.mxu0 0.0
        %751 = vmatpush1.xpose.msra.mxu0 0.0
        %752 = vmatprep.subr.mxu0 0.0
        %753 = vmatpush1.xpose.msra.mxu0 0.0
        %754 = vmatprep.subr.mxu0 0.0
        %755 = vmatpush1.xpose.msra.mxu0 0.0
        %756 = vmatprep.subr.mxu0 0.0
        %757 = vmatpush1.xpose.msra.mxu0 0.0
        %758 = vmatprep.subr.mxu0 0.0
        %759 = vmatpush1.xpose.msra.mxu0 %v726
        %760 = vmatprep.subr.mxu0 0.0
        %761 = vmatpush2.xpose.msra.mxu0 0.0
        %762 = vmatprep.subr.mxu0 0.0
        %763 = vmatpush2.xpose.msra.mxu0 0.0
        %764 = vmatprep.subr.mxu0 0.0
        %765 = vmatpush2.xpose.msra.mxu0 0.0
        %766 = vmatprep.subr.mxu0 0.0
        %767 = vmatpush2.xpose.msra.mxu0 0.0
        %768 = vmatprep.subr.mxu0 0.0
        %769 = vmatpush2.xpose.msra.mxu0 0.0
        %770 = vmatprep.subr.mxu0 0.0
        %771 = vmatpush2.xpose.msra.mxu0 0.0
        %772 = vmatprep.subr.mxu0 0.0
        %773 = vmatpush2.xpose.msra.mxu0 0.0
        %774 = vmatprep.subr.mxu0 0.0
        %775 = vmatpush2.xpose.msra.mxu0 0.0
        %776 = vmatprep.subr.mxu0 0.0
        %777 = vmatpush2.xpose.msra.mxu0 0.0
        %778 = vmatprep.subr.mxu0 0.0
        %779 = vmatpush2.xpose.msra.mxu0 0.0
        %780 = vmatprep.subr.mxu0 0.0
        %781 = vmatpush2.xpose.msra.mxu0 0.0
        %782 = vmatprep.subr.mxu0 0.0
        %783 = vmatpush2.xpose.msra.mxu0 0.0
        %784 = vmatprep.subr.mxu0 0.0
        %785 = vmatpush2.xpose.msra.mxu0 0.0
        %786 = vmatprep.subr.mxu0 0.0
        %787 = vmatpush2.xpose.msra.mxu0 0.0
        %788 = vmatprep.subr.mxu0 0.0
        %789 = vmatpush2.xpose.msra.mxu0 0.0
        %790 = vmatprep.subr.mxu0 0.0
        %791 = vmatpush2.xpose.msra.mxu0 0.0
        %792 = vmatprep.mubr.f32.mxu0 0.0
        %793 = vmatmul.mubr.f32.gmra.mxu0 %v715
        %v794 = vpop.f32.mrf.mxu0
        %v795 = vadd.f32 0.0, %v794
        %v796 = vpop.f32.mrf.mxu0
        %797 = vmatprep.mubr.f32.mxu0 0.0
        %798 = vmatmul.mubr.f32.gmra.mxu0 %v718
        %v799 = vpop.f32.mrf.mxu0
        %v800 = vadd.f32 0.0, %v799
        %v801 = vpop.f32.mrf.mxu0
        %802 = vmatprep.mubr.f32.mxu0 0.0
        %803 = vmatmul.mubr.f32.gmra.mxu0 %v721
        %v804 = vpop.f32.mrf.mxu0
        %v805 = vadd.f32 0.0, %v804
        %v806 = vpop.f32.mrf.mxu0
        %807 = vmatprep.mubr.f32.mxu0 0.0
        %808 = vmatmul.mubr.f32.gmra.mxu0 %v724
        %v809 = vpop.f32.mrf.mxu0
        %v810 = vadd.f32 0.0, %v809
        %v811 = vpop.f32.mrf.mxu0
        %812 = vdwg.mxu0
        %v813 = vmul.f32 %v795, 0.35355338
        %v814 = vmul.f32 %v800, 0.35355338
        %v815 = vmul.f32 %v805, 0.35355338
        %v816 = vmul.f32 %v810, 0.35355338
        %vm817 = vcmask 64512
        %v818 = vsel %vm817, %v813, -inf
        %819 = vmax.xlane.f32.xlu0 %v818
        %v820 = vpop.xlane.xlu0 %819
        %v821 = vsel %vm817, %v814, -inf
        %822 = vmax.xlane.f32.xlu0 %v821
        %v823 = vpop.xlane.xlu0 %822
        %v824 = vsel %vm817, %v815, -inf
        %825 = vmax.xlane.f32.xlu0 %v824
        %v826 = vpop.xlane.xlu0 %825
        %v827 = vsel %vm817, %v816, -inf
        %828 = vmax.xlane.f32.xlu0 %v827
        %v829 = vpop.xlane.xlu0 %828
        %v830 = vsub.f32 %v813, %v820
        %v831 = vsub.f32 %v814, %v823
        %v832 = vsub.f32 %v815, %v826
        %v833 = vsub.f32 %v816, %v829
        %v834 = vmul.f32 %v830, 1.442695
        %v835 = vpow.pop %v834
        %v836 = vmul.f32 %v831, 1.442695
        %v837 = vpow.pop %v836
        %v838 = vmul.f32 %v832, 1.442695
        %v839 = vpow.pop %v838
        %v840 = vmul.f32 %v833, 1.442695
        %v841 = vpow.pop %v840
        %v842 = vsel %vm817, %v835, 0.0
        %843 = vadd.xlane.f32.xlu0 %v842
        %v844 = vpop.xlane.xlu0 %843
        %v845 = vsel %vm817, %v837, 0.0
        %846 = vadd.xlane.f32.xlu0 %v845
        %v847 = vpop.xlane.xlu0 %846
        %v848 = vsel %vm817, %v839, 0.0
        %849 = vadd.xlane.f32.xlu0 %v848
        %v850 = vpop.xlane.xlu0 %849
        %v851 = vsel %vm817, %v841, 0.0
        %852 = vadd.xlane.f32.xlu0 %v851
        %v853 = vpop.xlane.xlu0 %852
        %v854 = vrcp.pop %v844
        %v855 = vrcp.pop %v847
        %v856 = vrcp.pop %v850
        %v857 = vrcp.pop %v853
        %v858 = vmul.f32 %v835, %v854
        %v859 = vmul.f32 %v837, %v855
        %v860 = vmul.f32 %v839, %v856
        %v861 = vmul.f32 %v841, %v857
        %862 = vrot.lane.b32.xlu0 %v641, 64
        %v863 = vpop.permute.xlu0 %862
        %v866 = vsel %vm817, %v858, 0
        %v869 = vsel %vm817, %v859, 0
        %v872 = vsel %vm817, %v860, 0
        %v875 = vsel %vm817, %v861, 0
        %877 = vmatprep.subr.mxu0 0.0
        %878 = vmatpush1.msra.mxu0 0.0
        %879 = vmatprep.subr.mxu0 0.0
        %880 = vmatpush1.msra.mxu0 0.0
        %881 = vmatprep.subr.mxu0 0.0
        %882 = vmatpush1.msra.mxu0 0.0
        %883 = vmatprep.subr.mxu0 0.0
        %884 = vmatpush1.msra.mxu0 0.0
        %885 = vmatprep.subr.mxu0 0.0
        %886 = vmatpush1.msra.mxu0 0.0
        %887 = vmatprep.subr.mxu0 0.0
        %888 = vmatpush1.msra.mxu0 0.0
        %889 = vmatprep.subr.mxu0 0.0
        %890 = vmatpush1.msra.mxu0 0.0
        %891 = vmatprep.subr.mxu0 0.0
        %892 = vmatpush1.msra.mxu0 0.0
        %893 = vmatprep.subr.mxu0 0.0
        %894 = vmatpush1.msra.mxu0 0.0
        %895 = vmatprep.subr.mxu0 0.0
        %896 = vmatpush1.msra.mxu0 0.0
        %897 = vmatprep.subr.mxu0 0.0
        %898 = vmatpush1.msra.mxu0 0.0
        %899 = vmatprep.subr.mxu0 0.0
        %900 = vmatpush1.msra.mxu0 0.0
        %901 = vmatprep.subr.mxu0 0.0
        %902 = vmatpush1.msra.mxu0 0.0
        %903 = vmatprep.subr.mxu0 0.0
        %904 = vmatpush1.msra.mxu0 0.0
        %905 = vmatprep.subr.mxu0 0.0
        %906 = vmatpush1.msra.mxu0 0.0
        %907 = vmatprep.subr.mxu0 0.0
        %908 = vmatpush1.msra.mxu0 %v863
        %909 = vmatprep.subr.mxu0 0.0
        %910 = vmatpush2.msra.mxu0 0.0
        %911 = vmatprep.subr.mxu0 0.0
        %912 = vmatpush2.msra.mxu0 0.0
        %913 = vmatprep.subr.mxu0 0.0
        %914 = vmatpush2.msra.mxu0 0.0
        %915 = vmatprep.subr.mxu0 0.0
        %916 = vmatpush2.msra.mxu0 0.0
        %917 = vmatprep.subr.mxu0 0.0
        %918 = vmatpush2.msra.mxu0 0.0
        %919 = vmatprep.subr.mxu0 0.0
        %920 = vmatpush2.msra.mxu0 0.0
        %921 = vmatprep.subr.mxu0 0.0
        %922 = vmatpush2.msra.mxu0 0.0
        %923 = vmatprep.subr.mxu0 0.0
        %924 = vmatpush2.msra.mxu0 0.0
        %925 = vmatprep.subr.mxu0 0.0
        %926 = vmatpush2.msra.mxu0 0.0
        %927 = vmatprep.subr.mxu0 0.0
        %928 = vmatpush2.msra.mxu0 0.0
        %929 = vmatprep.subr.mxu0 0.0
        %930 = vmatpush2.msra.mxu0 0.0
        %931 = vmatprep.subr.mxu0 0.0
        %932 = vmatpush2.msra.mxu0 0.0
        %933 = vmatprep.subr.mxu0 0.0
        %934 = vmatpush2.msra.mxu0 0.0
        %935 = vmatprep.subr.mxu0 0.0
        %936 = vmatpush2.msra.mxu0 0.0
        %937 = vmatprep.subr.mxu0 0.0
        %938 = vmatpush2.msra.mxu0 0.0
        %939 = vmatprep.subr.mxu0 0.0
        %940 = vmatpush2.msra.mxu0 0.0
        %941 = vmatprep.mubr.f32.mxu0 0.0
        %942 = vmatmul.mubr.f32.gmra.mxu0 %v866
        %v943 = vpop.f32.mrf.mxu0
        %v944 = vadd.f32 0.0, %v943
        %v945 = vpop.f32.mrf.mxu0
        %946 = vmatprep.mubr.f32.mxu0 0.0
        %947 = vmatmul.mubr.f32.gmra.mxu0 %v869
        %v948 = vpop.f32.mrf.mxu0
        %v949 = vadd.f32 0.0, %v948
        %v950 = vpop.f32.mrf.mxu0
        %951 = vmatprep.mubr.f32.mxu0 0.0
        %952 = vmatmul.mubr.f32.gmra.mxu0 %v872
        %v953 = vpop.f32.mrf.mxu0
        %v954 = vadd.f32 0.0, %v953
        %v955 = vpop.f32.mrf.mxu0
        %956 = vmatprep.mubr.f32.mxu0 0.0
        %957 = vmatmul.mubr.f32.gmra.mxu0 %v875
        %v958 = vpop.f32.mrf.mxu0
        %v959 = vadd.f32 0.0, %v958
        %v960 = vpop.f32.mrf.mxu0
        %961 = vdwg.mxu0
        %v962 = vsel %vm703, %v944, 0.0
        %v963 = vsel %vm704, %v949, 0.0
        %v964 = vsel %vm705, %v954, 0.0
        %v965 = vsel %vm706, %v959, 0.0
        %v966 = vsel %vm531, %v962, 0.0
        %v967 = vsel %vm531, %v963, 0.0
        %v968 = vadd.f32 %v966, %v967
        %v969 = vsel %vm531, %v964, 0.0
        %v970 = vadd.f32 %v968, %v969
        %v971 = vsel %vm531, %v965, 0.0
        %v972 = vadd.f32 %v970, %v971
        %v973 = vld [vmem:[%s5] sm:$0xff]
        %v974 = vld [vmem:[%s5 + $0x8] sm:$0xff]
        %v975 = vld [vmem:[%s5 + $0x10] sm:$0xff]
        %v976 = vld [vmem:[%s5 + $0x18] sm:$0xff]
        %v977 = vld [vmem:[%s6] sm:$0x1]
        %v979 = vlaneseq
        %v980 = vshrl.u32 %v979, 7
        %v981 = vsub.s32 0, %v980
        %v982 = vrot.slane %v977, %v981
        %v985 = vsel %vm531, %v972, 0
        %987 = vmatprep.subr.mxu0 0.0
        %988 = vmatpush1.msra.mxu0 0.0
        %989 = vmatprep.subr.mxu0 0.0
        %990 = vmatpush1.msra.mxu0 0.0
        %991 = vmatprep.subr.mxu0 0.0
        %992 = vmatpush1.msra.mxu0 0.0
        %993 = vmatprep.subr.mxu0 0.0
        %994 = vmatpush1.msra.mxu0 0.0
        %995 = vmatprep.subr.mxu0 0.0
        %996 = vmatpush1.msra.mxu0 0.0
        %997 = vmatprep.subr.mxu0 0.0
        %998 = vmatpush1.msra.mxu0 0.0
        %999 = vmatprep.subr.mxu0 0.0
        %1000 = vmatpush1.msra.mxu0 0.0
        %1001 = vmatprep.subr.mxu0 0.0
        %1002 = vmatpush1.msra.mxu0 0.0
        %1003 = vmatprep.subr.mxu0 0.0
        %1004 = vmatpush1.msra.mxu0 0.0
        %1005 = vmatprep.subr.mxu0 0.0
        %1006 = vmatpush1.msra.mxu0 0.0
        %1007 = vmatprep.subr.mxu0 0.0
        %1008 = vmatpush1.msra.mxu0 0.0
        %1009 = vmatprep.subr.mxu0 0.0
        %1010 = vmatpush1.msra.mxu0 0.0
        %1011 = vmatprep.subr.mxu0 0.0
        %1012 = vmatpush1.msra.mxu0 %v976
        %1013 = vmatprep.subr.mxu0 0.0
        %1014 = vmatpush1.msra.mxu0 %v975
        %1015 = vmatprep.subr.mxu0 0.0
        %1016 = vmatpush1.msra.mxu0 %v974
        %1017 = vmatprep.subr.mxu0 0.0
        %1018 = vmatpush1.msra.mxu0 %v973
        %1019 = vmatprep.subr.mxu0 0.0
        %1020 = vmatpush2.msra.mxu0 0.0
        %1021 = vmatprep.subr.mxu0 0.0
        %1022 = vmatpush2.msra.mxu0 0.0
        %1023 = vmatprep.subr.mxu0 0.0
        %1024 = vmatpush2.msra.mxu0 0.0
        %1025 = vmatprep.subr.mxu0 0.0
        %1026 = vmatpush2.msra.mxu0 0.0
        %1027 = vmatprep.subr.mxu0 0.0
        %1028 = vmatpush2.msra.mxu0 0.0
        %1029 = vmatprep.subr.mxu0 0.0
        %1030 = vmatpush2.msra.mxu0 0.0
        %1031 = vmatprep.subr.mxu0 0.0
        %1032 = vmatpush2.msra.mxu0 0.0
        %1033 = vmatprep.subr.mxu0 0.0
        %1034 = vmatpush2.msra.mxu0 0.0
        %1035 = vmatprep.subr.mxu0 0.0
        %1036 = vmatpush2.msra.mxu0 0.0
        %1037 = vmatprep.subr.mxu0 0.0
        %1038 = vmatpush2.msra.mxu0 0.0
        %1039 = vmatprep.subr.mxu0 0.0
        %1040 = vmatpush2.msra.mxu0 0.0
        %1041 = vmatprep.subr.mxu0 0.0
        %1042 = vmatpush2.msra.mxu0 0.0
        %1043 = vmatprep.subr.mxu0 0.0
        %1044 = vmatpush2.msra.mxu0 0.0
        %1045 = vmatprep.subr.mxu0 0.0
        %1046 = vmatpush2.msra.mxu0 0.0
        %1047 = vmatprep.subr.mxu0 0.0
        %1048 = vmatpush2.msra.mxu0 0.0
        %1049 = vmatprep.subr.mxu0 0.0
        %1050 = vmatpush2.msra.mxu0 0.0
        %1051 = vmatprep.mubr.f32.mxu0 0.0
        %1052 = vmatmul.mubr.f32.gmra.mxu0 %v985
        %v1053 = vpop.f32.mrf.mxu0
        %v1054 = vadd.f32 %v982, %v1053
        %v1055 = vpop.f32.mrf.mxu0
        %1056 = vdwg.mxu0
        %v1057 = vadd.f32 %v528, %v1054
        %v1058 = vld [vmem:[%s7] sm:$0x1]
        %v1059 = vld [vmem:[%s8] sm:$0x1]
        %v1060 = vsel %vm531, %v1057, 0.0
        %1061 = vadd.xlane.f32.xlu0 %v1060
        %v1062 = vpop.xlane.xlu0 %1061
        %v1063 = vmul.f32 %v1062, %v535
        %v1064 = vsub.f32 %v1057, %v1063
        %v1065 = vmul.f32 %v1064, %v1064
        %v1066 = vsel %vm531, %v1065, 0.0
        %1067 = vadd.xlane.f32.xlu0 %v1066
        %v1068 = vpop.xlane.xlu0 %1067
        %v1069 = vmul.f32 %v1068, %v535
        %v1070 = vadd.f32 %v1069, 1e-05
        %v1071 = vrsqrt.pop %v1070
        %v1072 = vmul.f32 %v1064, %v1071
        %v1074 = vlaneseq
        %v1075 = vshrl.u32 %v1074, 7
        %v1076 = vsub.s32 0, %v1075
        %v1077 = vrot.slane %v1058, %v1076
        %v1079 = vmul.f32 %v1072, %v1077
        %v1081 = vlaneseq
        %v1082 = vshrl.u32 %v1081, 7
        %v1083 = vsub.s32 0, %v1082
        %v1084 = vrot.slane %v1059, %v1083
        %v1086 = vadd.f32 %v1079, %v1084
        %v1087 = vld [vmem:[%s9] sm:$0xff]
        %v1088 = vld [vmem:[%s9 + $0x8] sm:$0xff]
        %v1089 = vld [vmem:[%s9 + $0x10] sm:$0xff]
        %v1090 = vld [vmem:[%s9 + $0x18] sm:$0xff]
        %v1091 = vld [vmem:[%s10] sm:$0x1]
        %v1093 = vlaneseq
        %v1094 = vshrl.u32 %v1093, 7
        %v1095 = vsub.s32 0, %v1094
        %v1096 = vrot.slane %v1091, %v1095
        %v1099 = vsel %vm531, %v1086, 0
        %1101 = vmatprep.subr.mxu0 0.0
        %1102 = vmatpush1.msra.mxu0 0.0
        %1103 = vmatprep.subr.mxu0 0.0
        %1104 = vmatpush1.msra.mxu0 0.0
        %1105 = vmatprep.subr.mxu0 0.0
        %1106 = vmatpush1.msra.mxu0 0.0
        %1107 = vmatprep.subr.mxu0 0.0
        %1108 = vmatpush1.msra.mxu0 0.0
        %1109 = vmatprep.subr.mxu0 0.0
        %1110 = vmatpush1.msra.mxu0 0.0
        %1111 = vmatprep.subr.mxu0 0.0
        %1112 = vmatpush1.msra.mxu0 0.0
        %1113 = vmatprep.subr.mxu0 0.0
        %1114 = vmatpush1.msra.mxu0 0.0
        %1115 = vmatprep.subr.mxu0 0.0
        %1116 = vmatpush1.msra.mxu0 0.0
        %1117 = vmatprep.subr.mxu0 0.0
        %1118 = vmatpush1.msra.mxu0 0.0
        %1119 = vmatprep.subr.mxu0 0.0
        %1120 = vmatpush1.msra.mxu0 0.0
        %1121 = vmatprep.subr.mxu0 0.0
        %1122 = vmatpush1.msra.mxu0 0.0
        %1123 = vmatprep.subr.mxu0 0.0
        %1124 = vmatpush1.msra.mxu0 0.0
        %1125 = vmatprep.subr.mxu0 0.0
        %1126 = vmatpush1.msra.mxu0 %v1090
        %1127 = vmatprep.subr.mxu0 0.0
        %1128 = vmatpush1.msra.mxu0 %v1089
        %1129 = vmatprep.subr.mxu0 0.0
        %1130 = vmatpush1.msra.mxu0 %v1088
        %1131 = vmatprep.subr.mxu0 0.0
        %1132 = vmatpush1.msra.mxu0 %v1087
        %1133 = vmatprep.subr.mxu0 0.0
        %1134 = vmatpush2.msra.mxu0 0.0
        %1135 = vmatprep.subr.mxu0 0.0
        %1136 = vmatpush2.msra.mxu0 0.0
        %1137 = vmatprep.subr.mxu0 0.0
        %1138 = vmatpush2.msra.mxu0 0.0
        %1139 = vmatprep.subr.mxu0 0.0
        %1140 = vmatpush2.msra.mxu0 0.0
        %1141 = vmatprep.subr.mxu0 0.0
        %1142 = vmatpush2.msra.mxu0 0.0
        %1143 = vmatprep.subr.mxu0 0.0
        %1144 = vmatpush2.msra.mxu0 0.0
        %1145 = vmatprep.subr.mxu0 0.0
        %1146 = vmatpush2.msra.mxu0 0.0
        %1147 = vmatprep.subr.mxu0 0.0
        %1148 = vmatpush2.msra.mxu0 0.0
        %1149 = vmatprep.subr.mxu0 0.0
        %1150 = vmatpush2.msra.mxu0 0.0
        %1151 = vmatprep.subr.mxu0 0.0
        %1152 = vmatpush2.msra.mxu0 0.0
        %1153 = vmatprep.subr.mxu0 0.0
        %1154 = vmatpush2.msra.mxu0 0.0
        %1155 = vmatprep.subr.mxu0 0.0
        %1156 = vmatpush2.msra.mxu0 0.0
        %1157 = vmatprep.subr.mxu0 0.0
        %1158 = vmatpush2.msra.mxu0 0.0
        %1159 = vmatprep.subr.mxu0 0.0
        %1160 = vmatpush2.msra.mxu0 0.0
        %1161 = vmatprep.subr.mxu0 0.0
        %1162 = vmatpush2.msra.mxu0 0.0
        %1163 = vmatprep.subr.mxu0 0.0
        %1164 = vmatpush2.msra.mxu0 0.0
        %1165 = vmatprep.mubr.f32.mxu0 0.0
        %1166 = vmatmul.mubr.f32.gmra.mxu0 %v1099
        %v1167 = vpop.f32.mrf.mxu0
        %v1168 = vadd.f32 %v1096, %v1167
        %v1169 = vpop.f32.mrf.mxu0
        %1170 = vdwg.mxu0
        %vm1171 = vcmask 31744
        %v1172 = vsel %vm1171, %v1168, -inf
        %1173 = vmax.xlane.f32.xlu0 %v1172
        %v1174 = vpop.xlane.xlu0 %1173
        %vm1175 = vcmp.eq.f32.partialorder %v1168, %v1174
        %v1176 = vsel %vm1175, %v647, 4
        %v1177 = vsel %vm1171, %v1176, 2147483647
        %v1178 = vand.u32 %v1177, 65535
        %v1179 = vshra.s32 %v1177, 16
        %v1180 = vcvt.s32.f32 %v1178
        %v1181 = vcvt.s32.f32 %v1179
        %1182 = vmin.xlane.f32.xlu0 %v1181
        %v1183 = vpop.xlane.xlu0 %1182
        %vm1184 = vcmp.eq.f32.partialorder %v1181, %v1183
        %v1185 = vsel %vm1184, %v1180, inf
        %1186 = vmin.xlane.f32.xlu0 %v1185
        %v1187 = vpop.xlane.xlu0 %1186
        %v1188 = vcvt.f32.s32 %v1187
        %v1189 = vcvt.f32.s32 %v1183
        %v1190 = vshll.u32 %v1189, 16
        %v1191 = vadd.s32 %v1190, %v1188
        %vm1192 = vcmp.eq.s32.totalorder %v647, %v1191
        %v1193 = vsel %vm1192, 1, 0
        %v1194 = vcvt.s32.f32 %v1193
        %1195 = vst.msk [vmem:[%s527] sm:$0xff] %vm1171, %v1194
        %v1196 = vld [vmem:[%s11] sm:$0xff]
        %v1197 = vld [vmem:[%s11 + $0x8] sm:$0xff]
        %v1198 = vld [vmem:[%s11 + $0x10] sm:$0xff]
        %v1199 = vld [vmem:[%s11 + $0x18] sm:$0xff]
        %v1200 = vld [vmem:[%s11 + $0x20] sm:$0xff]
        %v1201 = vld [vmem:[%s11 + $0x28] sm:$0xff]
        %v1202 = vld [vmem:[%s11 + $0x30] sm:$0xff]
        %v1203 = vld [vmem:[%s11 + $0x38] sm:$0xff]
        %v1204 = vld [vmem:[%s12] sm:$0x3]
        %v1206 = vlaneseq
        %v1207 = vshrl.u32 %v1206, 7
        %v1208 = vsub.s32 0, %v1207
        %v1209 = vrot.slane %v1204, %v1208
        %v1210 = vlaneseq
        %v1211 = vshrl.u32 %v1210, 7
        %v1212 = vsub.s32 1, %v1211
        %v1213 = vrot.slane %v1204, %v1212
        %1216 = vmatprep.subr.mxu0 0.0
        %1217 = vmatpush1.msra.mxu0 0.0
        %1218 = vmatprep.subr.mxu0 0.0
        %1219 = vmatpush1.msra.mxu0 0.0
        %1220 = vmatprep.subr.mxu0 0.0
        %1221 = vmatpush1.msra.mxu0 0.0
        %1222 = vmatprep.subr.mxu0 0.0
        %1223 = vmatpush1.msra.mxu0 0.0
        %1224 = vmatprep.subr.mxu0 0.0
        %1225 = vmatpush1.msra.mxu0 0.0
        %1226 = vmatprep.subr.mxu0 0.0
        %1227 = vmatpush1.msra.mxu0 0.0
        %1228 = vmatprep.subr.mxu0 0.0
        %1229 = vmatpush1.msra.mxu0 0.0
        %1230 = vmatprep.subr.mxu0 0.0
        %1231 = vmatpush1.msra.mxu0 0.0
        %1232 = vmatprep.subr.mxu0 0.0
        %1233 = vmatpush1.msra.mxu0 0.0
        %1234 = vmatprep.subr.mxu0 0.0
        %1235 = vmatpush1.msra.mxu0 0.0
        %1236 = vmatprep.subr.mxu0 0.0
        %1237 = vmatpush1.msra.mxu0 0.0
        %1238 = vmatprep.subr.mxu0 0.0
        %1239 = vmatpush1.msra.mxu0 0.0
        %1240 = vmatprep.subr.mxu0 %v1203
        %1241 = vmatpush1.msra.mxu0 %v1202
        %1242 = vmatprep.subr.mxu0 %v1201
        %1243 = vmatpush1.msra.mxu0 %v1200
        %1244 = vmatprep.subr.mxu0 %v1199
        %1245 = vmatpush1.msra.mxu0 %v1198
        %1246 = vmatprep.subr.mxu0 %v1197
        %1247 = vmatpush1.msra.mxu0 %v1196
        %1248 = vmatprep.subr.mxu0 0.0
        %1249 = vmatpush2.msra.mxu0 0.0
        %1250 = vmatprep.subr.mxu0 0.0
        %1251 = vmatpush2.msra.mxu0 0.0
        %1252 = vmatprep.subr.mxu0 0.0
        %1253 = vmatpush2.msra.mxu0 0.0
        %1254 = vmatprep.subr.mxu0 0.0
        %1255 = vmatpush2.msra.mxu0 0.0
        %1256 = vmatprep.subr.mxu0 0.0
        %1257 = vmatpush2.msra.mxu0 0.0
        %1258 = vmatprep.subr.mxu0 0.0
        %1259 = vmatpush2.msra.mxu0 0.0
        %1260 = vmatprep.subr.mxu0 0.0
        %1261 = vmatpush2.msra.mxu0 0.0
        %1262 = vmatprep.subr.mxu0 0.0
        %1263 = vmatpush2.msra.mxu0 0.0
        %1264 = vmatprep.subr.mxu0 0.0
        %1265 = vmatpush2.msra.mxu0 0.0
        %1266 = vmatprep.subr.mxu0 0.0
        %1267 = vmatpush2.msra.mxu0 0.0
        %1268 = vmatprep.subr.mxu0 0.0
        %1269 = vmatpush2.msra.mxu0 0.0
        %1270 = vmatprep.subr.mxu0 0.0
        %1271 = vmatpush2.msra.mxu0 0.0
        %1272 = vmatprep.subr.mxu0 0.0
        %1273 = vmatpush2.msra.mxu0 0.0
        %1274 = vmatprep.subr.mxu0 0.0
        %1275 = vmatpush2.msra.mxu0 0.0
        %1276 = vmatprep.subr.mxu0 0.0
        %1277 = vmatpush2.msra.mxu0 0.0
        %1278 = vmatprep.subr.mxu0 0.0
        %1279 = vmatpush2.msra.mxu0 0.0
        %1280 = vmatprep.mubr.f32.mxu0 0.0
        %1281 = vmatmul.mubr.f32.gmra.mxu0 %v1099
        %v1282 = vpop.f32.mrf.mxu0
        %v1283 = vadd.f32 %v1209, %v1282
        %v1284 = vpop.f32.mrf.mxu0
        %v1285 = vadd.f32 %v1213, %v1284
        %1286 = vdwg.mxu0
        %v1287 = vmax.f32 %v1283, 0.0
        %v1288 = vmax.f32 %v1285, 0.0
        %v1289 = vadd.s32 %v647, 128
        %v1290 = vmul.u32 %v1191, 64
        %vm1291 = vcmp.ge.s32.totalorder %v647, %v1290
        %vm1292 = vcmp.ge.s32.totalorder %v1289, %v1290
        %v1293 = vadd.s32 %v1290, 64
        %vm1294 = vcmp.lt.s32.totalorder %v647, %v1293
        %vm1295 = vcmp.lt.s32.totalorder %v1289, %v1293
        %vm1296 = vmand %vm1291, %vm1294
        %vm1297 = vmand %vm1292, %vm1295
        %v1298 = vsel %vm1296, %v1287, 0.0
        %v1299 = vsel %vm1297, %v1288, 0.0
        %v1300 = vld [vmem:[%s13] sm:$0xff]
        %v1301 = vld [vmem:[%s13 + $0x8] sm:$0xff]
        %v1302 = vld [vmem:[%s13 + $0x10] sm:$0xff]
        %v1303 = vld [vmem:[%s13 + $0x18] sm:$0xff]
        %v1304 = vld [vmem:[%s13 + $0x20] sm:$0xff]
        %v1305 = vld [vmem:[%s13 + $0x28] sm:$0xff]
        %v1306 = vld [vmem:[%s13 + $0x30] sm:$0xff]
        %v1307 = vld [vmem:[%s13 + $0x38] sm:$0xff]
        %v1308 = vld [vmem:[%s13 + $0x40] sm:$0xff]
        %v1309 = vld [vmem:[%s13 + $0x48] sm:$0xff]
        %v1310 = vld [vmem:[%s13 + $0x50] sm:$0xff]
        %v1311 = vld [vmem:[%s13 + $0x58] sm:$0xff]
        %v1312 = vld [vmem:[%s13 + $0x60] sm:$0xff]
        %v1313 = vld [vmem:[%s13 + $0x68] sm:$0xff]
        %v1314 = vld [vmem:[%s13 + $0x70] sm:$0xff]
        %v1315 = vld [vmem:[%s13 + $0x78] sm:$0xff]
        %v1316 = vld [vmem:[%s13 + $0x80] sm:$0xff]
        %v1317 = vld [vmem:[%s13 + $0x88] sm:$0xff]
        %v1318 = vld [vmem:[%s13 + $0x90] sm:$0xff]
        %v1319 = vld [vmem:[%s13 + $0x98] sm:$0xff]
        %v1320 = vld [vmem:[%s13 + $0xa0] sm:$0xff]
        %v1321 = vld [vmem:[%s13 + $0xa8] sm:$0xff]
        %v1322 = vld [vmem:[%s13 + $0xb0] sm:$0xff]
        %v1323 = vld [vmem:[%s13 + $0xb8] sm:$0xff]
        %v1324 = vld [vmem:[%s13 + $0xc0] sm:$0xff]
        %v1325 = vld [vmem:[%s13 + $0xc8] sm:$0xff]
        %v1326 = vld [vmem:[%s13 + $0xd0] sm:$0xff]
        %v1327 = vld [vmem:[%s13 + $0xd8] sm:$0xff]
        %v1328 = vld [vmem:[%s13 + $0xe0] sm:$0xff]
        %v1329 = vld [vmem:[%s13 + $0xe8] sm:$0xff]
        %v1330 = vld [vmem:[%s13 + $0xf0] sm:$0xff]
        %v1331 = vld [vmem:[%s13 + $0xf8] sm:$0xff]
        %v1332 = vld [vmem:[%s14] sm:$0xf]
        %v1334 = vsel %vm1171, %v1194, 0
        %vm1336 = vcmask 1043456
        %v1338 = vsel %vm1336, %v1332, 0
        %1340 = vmatprep.subr.mxu0 0.0
        %1341 = vmatpush1.msra.mxu0 0.0
        %1342 = vmatprep.subr.mxu0 0.0
        %1343 = vmatpush1.msra.mxu0 0.0
        %1344 = vmatprep.subr.mxu0 0.0
        %1345 = vmatpush1.msra.mxu0 0.0
        %1346 = vmatprep.subr.mxu0 0.0
        %1347 = vmatpush1.msra.mxu0 0.0
        %1348 = vmatprep.subr.mxu0 0.0
        %1349 = vmatpush1.msra.mxu0 0.0
        %1350 = vmatprep.subr.mxu0 0.0
        %1351 = vmatpush1.msra.mxu0 0.0
        %1352 = vmatprep.subr.mxu0 0.0
        %1353 = vmatpush1.msra.mxu0 0.0
        %1354 = vmatprep.subr.mxu0 0.0
        %1355 = vmatpush1.msra.mxu0 0.0
        %1356 = vmatprep.subr.mxu0 0.0
        %1357 = vmatpush1.msra.mxu0 0.0
        %1358 = vmatprep.subr.mxu0 0.0
        %1359 = vmatpush1.msra.mxu0 0.0
        %1360 = vmatprep.subr.mxu0 0.0
        %1361 = vmatpush1.msra.mxu0 0.0
        %1362 = vmatprep.subr.mxu0 0.0
        %1363 = vmatpush1.msra.mxu0 0.0
        %1364 = vmatprep.subr.mxu0 0.0
        %1365 = vmatpush1.msra.mxu0 0.0
        %1366 = vmatprep.subr.mxu0 0.0
        %1367 = vmatpush1.msra.mxu0 0.0
        %1368 = vmatprep.subr.mxu0 0.0
        %1369 = vmatpush1.msra.mxu0 0.0
        %1370 = vmatprep.subr.mxu0 0.0
        %1371 = vmatpush1.msra.mxu0 %v1338
        %1372 = vmatprep.subr.mxu0 0.0
        %1373 = vmatpush2.msra.mxu0 0.0
        %1374 = vmatprep.subr.mxu0 0.0
        %1375 = vmatpush2.msra.mxu0 0.0
        %1376 = vmatprep.subr.mxu0 0.0
        %1377 = vmatpush2.msra.mxu0 0.0
        %1378 = vmatprep.subr.mxu0 0.0
        %1379 = vmatpush2.msra.mxu0 0.0
        %1380 = vmatprep.subr.mxu0 0.0
        %1381 = vmatpush2.msra.mxu0 0.0
        %1382 = vmatprep.subr.mxu0 0.0
        %1383 = vmatpush2.msra.mxu0 0.0
        %1384 = vmatprep.subr.mxu0 0.0
        %1385 = vmatpush2.msra.mxu0 0.0
        %1386 = vmatprep.subr.mxu0 0.0
        %1387 = vmatpush2.msra.mxu0 0.0
        %1388 = vmatprep.subr.mxu0 0.0
        %1389 = vmatpush2.msra.mxu0 0.0
        %1390 = vmatprep.subr.mxu0 0.0
        %1391 = vmatpush2.msra.mxu0 0.0
        %1392 = vmatprep.subr.mxu0 0.0
        %1393 = vmatpush2.msra.mxu0 0.0
        %1394 = vmatprep.subr.mxu0 0.0
        %1395 = vmatpush2.msra.mxu0 0.0
        %1396 = vmatprep.subr.mxu0 0.0
        %1397 = vmatpush2.msra.mxu0 0.0
        %1398 = vmatprep.subr.mxu0 0.0
        %1399 = vmatpush2.msra.mxu0 0.0
        %1400 = vmatprep.subr.mxu0 0.0
        %1401 = vmatpush2.msra.mxu0 0.0
        %1402 = vmatprep.subr.mxu0 0.0
        %1403 = vmatpush2.msra.mxu0 0.0
        %1404 = vmatprep.mubr.f32.mxu0 0.0
        %1405 = vmatmul.mubr.f32.gmra.mxu0 %v1334
        %v1406 = vpop.f32.mrf.mxu0
        %v1407 = vadd.f32 0.0, %v1406
        %v1408 = vpop.f32.mrf.mxu0
        %1409 = vdwg.mxu0
        %1410 = vmatprep.subr.mxu0 0.0
        %1411 = vmatpush1.msra.mxu0 %v1315
        %1412 = vmatprep.subr.mxu0 0.0
        %1413 = vmatpush1.msra.mxu0 %v1314
        %1414 = vmatprep.subr.mxu0 0.0
        %1415 = vmatpush1.msra.mxu0 %v1313
        %1416 = vmatprep.subr.mxu0 0.0
        %1417 = vmatpush1.msra.mxu0 %v1312
        %1418 = vmatprep.subr.mxu0 0.0
        %1419 = vmatpush1.msra.mxu0 %v1311
        %1420 = vmatprep.subr.mxu0 0.0
        %1421 = vmatpush1.msra.mxu0 %v1310
        %1422 = vmatprep.subr.mxu0 0.0
        %1423 = vmatpush1.msra.mxu0 %v1309
        %1424 = vmatprep.subr.mxu0 0.0
        %1425 = vmatpush1.msra.mxu0 %v1308
        %1426 = vmatprep.subr.mxu0 0.0
        %1427 = vmatpush1.msra.mxu0 %v1307
        %1428 = vmatprep.subr.mxu0 0.0
        %1429 = vmatpush1.msra.mxu0 %v1306
        %1430 = vmatprep.subr.mxu0 0.0
        %1431 = vmatpush1.msra.mxu0 %v1305
        %1432 = vmatprep.subr.mxu0 0.0
        %1433 = vmatpush1.msra.mxu0 %v1304
        %1434 = vmatprep.subr.mxu0 0.0
        %1435 = vmatpush1.msra.mxu0 %v1303
        %1436 = vmatprep.subr.mxu0 0.0
        %1437 = vmatpush1.msra.mxu0 %v1302
        %1438 = vmatprep.subr.mxu0 0.0
        %1439 = vmatpush1.msra.mxu0 %v1301
        %1440 = vmatprep.subr.mxu0 0.0
        %1441 = vmatpush1.msra.mxu0 %v1300
        %1442 = vmatprep.subr.mxu0 0.0
        %1443 = vmatpush2.msra.mxu0 %v1331
        %1444 = vmatprep.subr.mxu0 0.0
        %1445 = vmatpush2.msra.mxu0 %v1330
        %1446 = vmatprep.subr.mxu0 0.0
        %1447 = vmatpush2.msra.mxu0 %v1329
        %1448 = vmatprep.subr.mxu0 0.0
        %1449 = vmatpush2.msra.mxu0 %v1328
        %1450 = vmatprep.subr.mxu0 0.0
        %1451 = vmatpush2.msra.mxu0 %v1327
        %1452 = vmatprep.subr.mxu0 0.0
        %1453 = vmatpush2.msra.mxu0 %v1326
        %1454 = vmatprep.subr.mxu0 0.0
        %1455 = vmatpush2.msra.mxu0 %v1325
        %1456 = vmatprep.subr.mxu0 0.0
        %1457 = vmatpush2.msra.mxu0 %v1324
        %1458 = vmatprep.subr.mxu0 0.0
        %1459 = vmatpush2.msra.mxu0 %v1323
        %1460 = vmatprep.subr.mxu0 0.0
        %1461 = vmatpush2.msra.mxu0 %v1322
        %1462 = vmatprep.subr.mxu0 0.0
        %1463 = vmatpush2.msra.mxu0 %v1321
        %1464 = vmatprep.subr.mxu0 0.0
        %1465 = vmatpush2.msra.mxu0 %v1320
        %1466 = vmatprep.subr.mxu0 0.0
        %1467 = vmatpush2.msra.mxu0 %v1319
        %1468 = vmatprep.subr.mxu0 0.0
        %1469 = vmatpush2.msra.mxu0 %v1318
        %1470 = vmatprep.subr.mxu0 0.0
        %1471 = vmatpush2.msra.mxu0 %v1317
        %1472 = vmatprep.subr.mxu0 0.0
        %1473 = vmatpush2.msra.mxu0 %v1316
        %1474 = vmatprep.mubr.f32.mxu0 %v1299
        %1475 = vmatmul.mubr.f32.gmra.mxu0 %v1298
        %v1476 = vpop.f32.mrf.mxu0
        %v1477 = vadd.f32 %v1407, %v1476
        %v1478 = vpop.f32.mrf.mxu0
        %1479 = vdwg.mxu0
        %v1480 = vadd.f32 %v1057, %v1477
        %1481 = vst.msk [vmem:[%s513] sm:$0xff] %vm531, %v1480
        %s1482 = sand.u32 %s359, 1
        %s1483 = scalar_lea.sflag [#allocation3], %s1482
        %s1484 = sand.u32 %s359, 1
        %s1485 = smul.addr %s1484, 8
        %s1486 = scalar_lea.vmem [#allocation2], %s1485
        %p1487 = scmp.lt.s32.totalorder %s31, 1
        %s1488 = scalar_select %p1487, %s31, 1
        %s1489 = smul.addr %s1488, 8
        %s1490 = scalar_lea.vmem %s16, %s1489
        // Predicated region
        $region81: #{tpu_custom_call.1} parent=79 // pred_check
          %p1491 = pneg %p369
        $region82: #{tpu_custom_call.1} parent=79 // pred_check_branch
          %1493 = sbr.rel (%p1491) target = $region84
        $region83: #{tpu_custom_call.1} parent=79 // pred_region
          %s1495 = ssub.s32 128, 128
          %1496 = vsyncadd %s1483, %s1495
          %s1497 = smul.addr %s31, 128
          %s1498 = scalar_lea.hbm %s15, %s1497
          %s1500 = sshll.u32 %s1486, 4
          %s1501 = int_to_ptr.vmem [resolvable:$true] %s1500
          %1503 = dma.vmem_to_hbm [thread:$0]  %s1501, 128, %s1498, %s1483
        $region84: #{tpu_custom_call.1} parent=79 // pred_fallthru
          _
        // Predicated region
        $region85: #{tpu_custom_call.1} parent=79 // pred_check
          %p1504 = pneg %p395
        $region86: #{tpu_custom_call.1} parent=79 // pred_check_branch
          %1506 = sbr.rel (%p1504) target = $region88
        $region87: #{tpu_custom_call.1} parent=79 // pred_region
          _
        $region88: #{tpu_custom_call.1} parent=79 // pred_fallthru
          _
      $region80: #{tpu_custom_call.1} parent=5 // pred_fallthru
        _
      %p1507 = scmp.le.s32.totalorder 2, %s26
      // Predicated region
      $region89: #{tpu_custom_call.1} parent=5 // pred_check
        %p1508 = pneg %p1507
      $region90: #{tpu_custom_call.1} parent=5 // pred_check_branch
        %1510 = sbr.rel (%p1508) target = $region92
      $region91: #{tpu_custom_call.1} parent=5 // pred_region
        %s1511 = ssub.s32 %s26, 2
        // Predicated region
        $region93: #{tpu_custom_call.1} parent=91 // pred_check
          %p1512 = pneg %p375
        $region94: #{tpu_custom_call.1} parent=91 // pred_check_branch
          %1514 = sbr.rel (%p1512) target = $region96
        $region95: #{tpu_custom_call.1} parent=91 // pred_region
          %s1515 = sand.u32 %s360, 1
          %s1516 = scalar_lea.sflag [#allocation3], %s1515
          %s1517 = sand.u32 %s360, 1
          %s1518 = smul.addr %s1517, 8
          %s1519 = scalar_lea.vmem [#allocation2], %s1518
          %1520 = dma.done %s1516, 128
        $region96: #{tpu_custom_call.1} parent=91 // pred_fallthru
          _
        // Predicated region
        $region97: #{tpu_custom_call.1} parent=91 // pred_check
          %p1521 = pneg %p401
        $region98: #{tpu_custom_call.1} parent=91 // pred_check_branch
          %1523 = sbr.rel (%p1521) target = $region100
        $region99: #{tpu_custom_call.1} parent=91 // pred_region
          %p1524 = scmp.lt.s32.totalorder %s32, 1
          %s1525 = scalar_select %p1524, %s32, 1
          %s1526 = smul.addr %s1525, 8
          %s1527 = scalar_lea.vmem %s16, %s1526
        $region100: #{tpu_custom_call.1} parent=91 // pred_fallthru
          _
      $region92: #{tpu_custom_call.1} parent=5 // pred_fallthru
        _
    $region6: #{tpu_custom_call.1} parent=1 // loop_footer
      %s30 = sadd.s32 1, %s26
    $region7: #{tpu_custom_call.1} parent=1 // loop_footer_branch
      %25 = sbr.rel target = $region3
    $region8: #{tpu_custom_call.1} parent=1 // loop_exit
      _
    %1528 = vsyncpa [#allocation3], 1
    %s1529 = scalar_lea.sflag [#allocation3], 1
    %1530 = vsyncpa %s1529, 1

</llo_original>
